<compile_context>
chip_gen: v7x
topology: tpu7x:2x2x1
jax: 0.10.0
libtpu: 0.0.40
codegen_flags: <defaults>
</compile_context>

<pallas_src>
import jax
import jax.numpy as jnp
from jax.experimental import pallas as pl
from jax.experimental.pallas import tpu as pltpu

HIDDEN = 50
INPUT_SIZE = 1
OUTPUT_SIZE = 1


def flight_lstm_kernel(x_proj_ref, w_hh_ref, w_fc_ref, b_fc_ref, out_ref):
    """One batch tile of the full forward pass.

    x_proj_ref : (T, BT, 4*GP) f32   precomputed x_t @ W_ih^T + b, gate-padded
    w_hh_ref   : (Hp, 4*GP)    f32   recurrent weights, rows/lanes zero-padded
    w_fc_ref   : (1, Hp)       f32   FC row, zero-padded
    b_fc_ref   : (1, 1)        f32
    out_ref    : (BT, 1)       f32
    """
    T, BT, G = x_proj_ref.shape
    Hp = w_hh_ref.shape[0]
    GP = G // 4                       # lanes per gate (multiple of 128)
    assert GP == Hp                   # padded gate width == padded hidden width

    w_hh = w_hh_ref[...]              # hoisted: loaded once, reused every step

    h = jnp.zeros((BT, Hp), jnp.float32)
    c = jnp.zeros((BT, Hp), jnp.float32)

    # Fully unrolled recurrence (T is static and small); every gate slice below
    # starts at a 128-lane boundary, so no cross-lane relayout per step.
    for t in range(T):
        gates = x_proj_ref[t] + jnp.dot(h, w_hh, preferred_element_type=jnp.float32)
        i_g = jax.nn.sigmoid(gates[:, 0 * GP:1 * GP])
        f_g = jax.nn.sigmoid(gates[:, 1 * GP:2 * GP])
        g_g = jnp.tanh(gates[:, 2 * GP:3 * GP])
        o_g = jax.nn.sigmoid(gates[:, 3 * GP:4 * GP])
        c = f_g * c + i_g * g_g
        h = o_g * jnp.tanh(c)

    # output[:, -1, :] -> relu -> fc1 (N=1: VPU multiply + lane reduction, no MXU)
    h_relu = jnp.maximum(h, 0.0)
    out = jnp.sum(h_relu * w_fc_ref[...], axis=-1, keepdims=True) + b_fc_ref[...]
    out_ref[...] = out.astype(out_ref.dtype)


def flight_model_forward(x, params):
    """x: (B, T, I) float32 batch_first, like the PyTorch module. Returns (B, 1)."""
    w_ih, w_hh, b_ih, b_hh, w_fc, b_fc = params
    B, T, I = x.shape
    H = HIDDEN
    f32 = jnp.float32

    GP = ((H + 127) // 128) * 128     # per-gate lane padding (128 for H=50)
    Hp = GP                           # padded hidden width for h / c / W_hh rows

    # Batch tiling: pad to a sublane multiple; tile large batches at 128 rows.
    if B <= 128:
        BT = max(8, ((B + 7) // 8) * 8)
        Bp = BT
    else:
        BT = 128
        Bp = ((B + BT - 1) // BT) * BT
    grid = (Bp // BT,)

    # ---- Precompute the input projection + combined bias for every timestep.
    # PyTorch gate order along the 4H axis is (i, f, g, o).
    w_ih_g = w_ih.astype(f32).reshape(4, H, I)
    w_ih_pad = jnp.pad(w_ih_g, ((0, 0), (0, GP - H), (0, 0)))            # (4, GP, I)
    b_g = (b_ih + b_hh).astype(f32).reshape(4, H)
    b_pad = jnp.pad(b_g, ((0, 0), (0, GP - H))).reshape(4 * GP)          # (4*GP,)

    x_f = x.astype(f32)                                                   # (B, T, I)
    x_proj = jnp.einsum("bti,gpi->btgp", x_f, w_ih_pad).reshape(B, T, 4 * GP) + b_pad
    x_proj = jnp.transpose(x_proj, (1, 0, 2))                             # (T, B, 4*GP)
    x_proj = jnp.pad(x_proj, ((0, 0), (0, Bp - B), (0, 0)))               # (T, Bp, 4*GP)

    # ---- Recurrent weights: (4H, H) -> (Hp, 4*GP), zero in all padding rows/lanes.
    w_hh_t = w_hh.astype(f32).T.reshape(H, 4, H)                          # (H, 4, H)
    w_hh_pad = jnp.pad(w_hh_t, ((0, Hp - H), (0, 0), (0, GP - H))).reshape(Hp, 4 * GP)

    # ---- FC head as a (1, Hp) row for the multiply + lane-reduce epilogue.
    w_fc_pad = jnp.pad(w_fc.astype(f32), ((0, 0), (0, Hp - H)))           # (1, Hp)
    b_fc_2d = b_fc.astype(f32).reshape(1, OUTPUT_SIZE)                    # (1, 1)

    out = pl.pallas_call(
        flight_lstm_kernel,
        out_shape=jax.ShapeDtypeStruct((Bp, OUTPUT_SIZE), f32),
        grid=grid,
        in_specs=[
            pl.BlockSpec((T, BT, 4 * GP), lambda b: (0, b, 0)),
            pl.BlockSpec((Hp, 4 * GP), lambda b: (0, 0)),
            pl.BlockSpec((1, Hp), lambda b: (0, 0)),
            pl.BlockSpec((1, OUTPUT_SIZE), lambda b: (0, 0)),
        ],
        out_specs=pl.BlockSpec((BT, OUTPUT_SIZE), lambda b: (b, 0)),
        compiler_params=pltpu.CompilerParams(dimension_semantics=("parallel",)),
    )(x_proj, w_hh_pad, w_fc_pad, b_fc_2d)
    return out[:B]


def flight_model_reference(x, params):
    """Pure-JAX reference of the PyTorch forward (for verification)."""
    w_ih, w_hh, b_ih, b_hh, w_fc, b_fc = params
    B, T, I = x.shape
    H = HIDDEN
    h = jnp.zeros((B, H), jnp.float32)
    c = jnp.zeros((B, H), jnp.float32)
    for t in range(T):
        gates = x[:, t, :] @ w_ih.T + b_ih + h @ w_hh.T + b_hh
        i_g = jax.nn.sigmoid(gates[:, 0:H])
        f_g = jax.nn.sigmoid(gates[:, H:2 * H])
        g_g = jnp.tanh(gates[:, 2 * H:3 * H])
        o_g = jax.nn.sigmoid(gates[:, 3 * H:4 * H])
        c = f_g * c + i_g * g_g
        h = o_g * jnp.tanh(c)
    h = jnp.maximum(h, 0.0)
    return h @ w_fc.T + b_fc


def init_params(key):
    """Deterministic init matching PyTorch default shapes/ranges."""
    H, I, O = HIDDEN, INPUT_SIZE, OUTPUT_SIZE
    k_lstm = 1.0 / jnp.sqrt(jnp.float32(H))
    k_fc = 1.0 / jnp.sqrt(jnp.float32(H))
    ks = jax.random.split(key, 6)
    w_ih = jax.random.uniform(ks[0], (4 * H, I), jnp.float32, -k_lstm, k_lstm)
    w_hh = jax.random.uniform(ks[1], (4 * H, H), jnp.float32, -k_lstm, k_lstm)
    b_ih = jax.random.uniform(ks[2], (4 * H,), jnp.float32, -k_lstm, k_lstm)
    b_hh = jax.random.uniform(ks[3], (4 * H,), jnp.float32, -k_lstm, k_lstm)
    w_fc = jax.random.uniform(ks[4], (O, H), jnp.float32, -k_fc, k_fc)
    b_fc = jax.random.uniform(ks[5], (O,), jnp.float32, -k_fc, k_fc)
    return (w_ih, w_hh, b_ih, b_hh, w_fc, b_fc)


if __name__ == "__main__":
    key = jax.random.PRNGKey(0)
    k_param, k_x = jax.random.split(key)
    params = init_params(k_param)

    B, T, I = 2, 8, INPUT_SIZE
    x = jax.random.normal(k_x, (B, T, I), jnp.float32)

    out = flight_model_forward(x, params)
    out = jax.block_until_ready(out)

    ref = flight_model_reference(x, params)
    assert out.shape == (B, OUTPUT_SIZE), out.shape
    assert jnp.allclose(out, ref, rtol=1e-4, atol=1e-4), (out, ref)
    print("KERNEL_OK")
</pallas_src>

<mosaic_0001>
module attributes {stable_mosaic.version = 11 : i64} {
  func.func @flight_lstm_kernel(%arg0: i32, %arg1: memref<8x8x512xf32, #tpu.memory_space<vmem>>, %arg2: memref<128x512xf32, #tpu.memory_space<vmem>>, %arg3: memref<1x128xf32, #tpu.memory_space<vmem>>, %arg4: memref<1x1xf32, #tpu.memory_space<vmem>>, %arg5: memref<8x1xf32, #tpu.memory_space<vmem>>) attributes {dimension_semantics = [#tpu.dimension_semantics<parallel>], iteration_bounds = array<i64: 1>, scalar_prefetch = 0 : i64, scratch_operands = 0 : i64, tpu.core_type = #tpu.core_type<tc>, window_params = [{transform_indices = @transform_0, window_bounds = array<i64: 8, 8, 512>}, {pipeline_mode = #tpu.pipeline_mode<synchronous>, transform_indices = @transform_1, window_bounds = array<i64: 128, 512>}, {pipeline_mode = #tpu.pipeline_mode<synchronous>, transform_indices = @transform_2, window_bounds = array<i64: 1, 128>}, {pipeline_mode = #tpu.pipeline_mode<synchronous>, transform_indices = @transform_3, window_bounds = array<i64: 1, 1>}, {transform_indices = @transform_4, window_bounds = array<i64: 8, 1>}]} {
    %c0 = arith.constant 0 : index
    %c0_0 = arith.constant 0 : index
    %0 = vector.load %arg2[%c0, %c0_0] : memref<128x512xf32, #tpu.memory_space<vmem>>, vector<128x512xf32>
    %cst = arith.constant 0.000000e+00 : f32
    %1 = vector.broadcast %cst : f32 to vector<8x128xf32>
    %cst_1 = arith.constant 0.000000e+00 : f32
    %2 = vector.broadcast %cst_1 : f32 to vector<8x128xf32>
    %c0_2 = arith.constant 0 : index
    %c0_3 = arith.constant 0 : index
    %c0_4 = arith.constant 0 : index
    %3 = vector.load %arg1[%c0_2, %c0_3, %c0_4] : memref<8x8x512xf32, #tpu.memory_space<vmem>>, vector<1x8x512xf32>
    %4 = vector.shape_cast %3 : vector<1x8x512xf32> to vector<8x512xf32>
    %cst_5 = arith.constant dense<0.000000e+00> : vector<8x512xf32>
    %5 = tpu.matmul %1, %0, %cst_5 {dimension_numbers = #tpu.dot_dimension_numbers<[1], [0], [0], [1], [0, 0, 1, 1], [], []>} : vector<8x128xf32>, vector<128x512xf32>, vector<8x512xf32> -> vector<8x512xf32>
    %6 = arith.addf %4, %5 : vector<8x512xf32>
    %7 = vector.extract_strided_slice %6 {offsets = [0, 0], sizes = [8, 128], strides = [1, 1]} : vector<8x512xf32> to vector<8x128xf32>
    %8 = arith.negf %7 : vector<8x128xf32>
    %9 = math.exp %8 : vector<8x128xf32>
    %cst_6 = arith.constant 1.000000e+00 : f32
    %10 = vector.broadcast %cst_6 : f32 to vector<8x128xf32>
    %11 = arith.addf %10, %9 : vector<8x128xf32>
    %12 = arith.divf %10, %11 : vector<8x128xf32>
    %13 = vector.extract_strided_slice %6 {offsets = [0, 128], sizes = [8, 128], strides = [1, 1]} : vector<8x512xf32> to vector<8x128xf32>
    %14 = arith.negf %13 : vector<8x128xf32>
    %15 = math.exp %14 : vector<8x128xf32>
    %cst_7 = arith.constant 1.000000e+00 : f32
    %16 = vector.broadcast %cst_7 : f32 to vector<8x128xf32>
    %17 = arith.addf %16, %15 : vector<8x128xf32>
    %18 = arith.divf %16, %17 : vector<8x128xf32>
    %19 = vector.extract_strided_slice %6 {offsets = [0, 256], sizes = [8, 128], strides = [1, 1]} : vector<8x512xf32> to vector<8x128xf32>
    %20 = math.tanh %19 : vector<8x128xf32>
    %21 = vector.extract_strided_slice %6 {offsets = [0, 384], sizes = [8, 128], strides = [1, 1]} : vector<8x512xf32> to vector<8x128xf32>
    %22 = arith.negf %21 : vector<8x128xf32>
    %23 = math.exp %22 : vector<8x128xf32>
    %cst_8 = arith.constant 1.000000e+00 : f32
    %24 = vector.broadcast %cst_8 : f32 to vector<8x128xf32>
    %25 = arith.addf %24, %23 : vector<8x128xf32>
    %26 = arith.divf %24, %25 : vector<8x128xf32>
    %27 = arith.mulf %18, %2 : vector<8x128xf32>
    %28 = arith.mulf %12, %20 : vector<8x128xf32>
    %29 = arith.addf %27, %28 : vector<8x128xf32>
    %30 = math.tanh %29 : vector<8x128xf32>
    %31 = arith.mulf %26, %30 : vector<8x128xf32>
    %c1 = arith.constant 1 : index
    %c0_9 = arith.constant 0 : index
    %c0_10 = arith.constant 0 : index
    %32 = vector.load %arg1[%c1, %c0_9, %c0_10] : memref<8x8x512xf32, #tpu.memory_space<vmem>>, vector<1x8x512xf32>
    %33 = vector.shape_cast %32 : vector<1x8x512xf32> to vector<8x512xf32>
    %cst_11 = arith.constant dense<0.000000e+00> : vector<8x512xf32>
    %34 = tpu.matmul %31, %0, %cst_11 {dimension_numbers = #tpu.dot_dimension_numbers<[1], [0], [0], [1], [0, 0, 1, 1], [], []>} : vector<8x128xf32>, vector<128x512xf32>, vector<8x512xf32> -> vector<8x512xf32>
    %35 = arith.addf %33, %34 : vector<8x512xf32>
    %36 = vector.extract_strided_slice %35 {offsets = [0, 0], sizes = [8, 128], strides = [1, 1]} : vector<8x512xf32> to vector<8x128xf32>
    %37 = arith.negf %36 : vector<8x128xf32>
    %38 = math.exp %37 : vector<8x128xf32>
    %cst_12 = arith.constant 1.000000e+00 : f32
    %39 = vector.broadcast %cst_12 : f32 to vector<8x128xf32>
    %40 = arith.addf %39, %38 : vector<8x128xf32>
    %41 = arith.divf %39, %40 : vector<8x128xf32>
    %42 = vector.extract_strided_slice %35 {offsets = [0, 128], sizes = [8, 128], strides = [1, 1]} : vector<8x512xf32> to vector<8x128xf32>
    %43 = arith.negf %42 : vector<8x128xf32>
    %44 = math.exp %43 : vector<8x128xf32>
    %cst_13 = arith.constant 1.000000e+00 : f32
    %45 = vector.broadcast %cst_13 : f32 to vector<8x128xf32>
    %46 = arith.addf %45, %44 : vector<8x128xf32>
    %47 = arith.divf %45, %46 : vector<8x128xf32>
    %48 = vector.extract_strided_slice %35 {offsets = [0, 256], sizes = [8, 128], strides = [1, 1]} : vector<8x512xf32> to vector<8x128xf32>
    %49 = math.tanh %48 : vector<8x128xf32>
    %50 = vector.extract_strided_slice %35 {offsets = [0, 384], sizes = [8, 128], strides = [1, 1]} : vector<8x512xf32> to vector<8x128xf32>
    %51 = arith.negf %50 : vector<8x128xf32>
    %52 = math.exp %51 : vector<8x128xf32>
    %cst_14 = arith.constant 1.000000e+00 : f32
    %53 = vector.broadcast %cst_14 : f32 to vector<8x128xf32>
    %54 = arith.addf %53, %52 : vector<8x128xf32>
    %55 = arith.divf %53, %54 : vector<8x128xf32>
    %56 = arith.mulf %47, %29 : vector<8x128xf32>
    %57 = arith.mulf %41, %49 : vector<8x128xf32>
    %58 = arith.addf %56, %57 : vector<8x128xf32>
    %59 = math.tanh %58 : vector<8x128xf32>
    %60 = arith.mulf %55, %59 : vector<8x128xf32>
    %c2 = arith.constant 2 : index
    %c0_15 = arith.constant 0 : index
    %c0_16 = arith.constant 0 : index
    %61 = vector.load %arg1[%c2, %c0_15, %c0_16] : memref<8x8x512xf32, #tpu.memory_space<vmem>>, vector<1x8x512xf32>
    %62 = vector.shape_cast %61 : vector<1x8x512xf32> to vector<8x512xf32>
    %cst_17 = arith.constant dense<0.000000e+00> : vector<8x512xf32>
    %63 = tpu.matmul %60, %0, %cst_17 {dimension_numbers = #tpu.dot_dimension_numbers<[1], [0], [0], [1], [0, 0, 1, 1], [], []>} : vector<8x128xf32>, vector<128x512xf32>, vector<8x512xf32> -> vector<8x512xf32>
    %64 = arith.addf %62, %63 : vector<8x512xf32>
    %65 = vector.extract_strided_slice %64 {offsets = [0, 0], sizes = [8, 128], strides = [1, 1]} : vector<8x512xf32> to vector<8x128xf32>
    %66 = arith.negf %65 : vector<8x128xf32>
    %67 = math.exp %66 : vector<8x128xf32>
    %cst_18 = arith.constant 1.000000e+00 : f32
    %68 = vector.broadcast %cst_18 : f32 to vector<8x128xf32>
    %69 = arith.addf %68, %67 : vector<8x128xf32>
    %70 = arith.divf %68, %69 : vector<8x128xf32>
    %71 = vector.extract_strided_slice %64 {offsets = [0, 128], sizes = [8, 128], strides = [1, 1]} : vector<8x512xf32> to vector<8x128xf32>
    %72 = arith.negf %71 : vector<8x128xf32>
    %73 = math.exp %72 : vector<8x128xf32>
    %cst_19 = arith.constant 1.000000e+00 : f32
    %74 = vector.broadcast %cst_19 : f32 to vector<8x128xf32>
    %75 = arith.addf %74, %73 : vector<8x128xf32>
    %76 = arith.divf %74, %75 : vector<8x128xf32>
    %77 = vector.extract_strided_slice %64 {offsets = [0, 256], sizes = [8, 128], strides = [1, 1]} : vector<8x512xf32> to vector<8x128xf32>
    %78 = math.tanh %77 : vector<8x128xf32>
    %79 = vector.extract_strided_slice %64 {offsets = [0, 384], sizes = [8, 128], strides = [1, 1]} : vector<8x512xf32> to vector<8x128xf32>
    %80 = arith.negf %79 : vector<8x128xf32>
    %81 = math.exp %80 : vector<8x128xf32>
    %cst_20 = arith.constant 1.000000e+00 : f32
    %82 = vector.broadcast %cst_20 : f32 to vector<8x128xf32>
    %83 = arith.addf %82, %81 : vector<8x128xf32>
    %84 = arith.divf %82, %83 : vector<8x128xf32>
    %85 = arith.mulf %76, %58 : vector<8x128xf32>
    %86 = arith.mulf %70, %78 : vector<8x128xf32>
    %87 = arith.addf %85, %86 : vector<8x128xf32>
    %88 = math.tanh %87 : vector<8x128xf32>
    %89 = arith.mulf %84, %88 : vector<8x128xf32>
    %c3 = arith.constant 3 : index
    %c0_21 = arith.constant 0 : index
    %c0_22 = arith.constant 0 : index
    %90 = vector.load %arg1[%c3, %c0_21, %c0_22] : memref<8x8x512xf32, #tpu.memory_space<vmem>>, vector<1x8x512xf32>
    %91 = vector.shape_cast %90 : vector<1x8x512xf32> to vector<8x512xf32>
    %cst_23 = arith.constant dense<0.000000e+00> : vector<8x512xf32>
    %92 = tpu.matmul %89, %0, %cst_23 {dimension_numbers = #tpu.dot_dimension_numbers<[1], [0], [0], [1], [0, 0, 1, 1], [], []>} : vector<8x128xf32>, vector<128x512xf32>, vector<8x512xf32> -> vector<8x512xf32>
    %93 = arith.addf %91, %92 : vector<8x512xf32>
    %94 = vector.extract_strided_slice %93 {offsets = [0, 0], sizes = [8, 128], strides = [1, 1]} : vector<8x512xf32> to vector<8x128xf32>
    %95 = arith.negf %94 : vector<8x128xf32>
    %96 = math.exp %95 : vector<8x128xf32>
    %cst_24 = arith.constant 1.000000e+00 : f32
    %97 = vector.broadcast %cst_24 : f32 to vector<8x128xf32>
    %98 = arith.addf %97, %96 : vector<8x128xf32>
    %99 = arith.divf %97, %98 : vector<8x128xf32>
    %100 = vector.extract_strided_slice %93 {offsets = [0, 128], sizes = [8, 128], strides = [1, 1]} : vector<8x512xf32> to vector<8x128xf32>
    %101 = arith.negf %100 : vector<8x128xf32>
    %102 = math.exp %101 : vector<8x128xf32>
    %cst_25 = arith.constant 1.000000e+00 : f32
    %103 = vector.broadcast %cst_25 : f32 to vector<8x128xf32>
    %104 = arith.addf %103, %102 : vector<8x128xf32>
    %105 = arith.divf %103, %104 : vector<8x128xf32>
    %106 = vector.extract_strided_slice %93 {offsets = [0, 256], sizes = [8, 128], strides = [1, 1]} : vector<8x512xf32> to vector<8x128xf32>
    %107 = math.tanh %106 : vector<8x128xf32>
    %108 = vector.extract_strided_slice %93 {offsets = [0, 384], sizes = [8, 128], strides = [1, 1]} : vector<8x512xf32> to vector<8x128xf32>
    %109 = arith.negf %108 : vector<8x128xf32>
    %110 = math.exp %109 : vector<8x128xf32>
    %cst_26 = arith.constant 1.000000e+00 : f32
    %111 = vector.broadcast %cst_26 : f32 to vector<8x128xf32>
    %112 = arith.addf %111, %110 : vector<8x128xf32>
    %113 = arith.divf %111, %112 : vector<8x128xf32>
    %114 = arith.mulf %105, %87 : vector<8x128xf32>
    %115 = arith.mulf %99, %107 : vector<8x128xf32>
    %116 = arith.addf %114, %115 : vector<8x128xf32>
    %117 = math.tanh %116 : vector<8x128xf32>
    %118 = arith.mulf %113, %117 : vector<8x128xf32>
    %c4 = arith.constant 4 : index
    %c0_27 = arith.constant 0 : index
    %c0_28 = arith.constant 0 : index
    %119 = vector.load %arg1[%c4, %c0_27, %c0_28] : memref<8x8x512xf32, #tpu.memory_space<vmem>>, vector<1x8x512xf32>
    %120 = vector.shape_cast %119 : vector<1x8x512xf32> to vector<8x512xf32>
    %cst_29 = arith.constant dense<0.000000e+00> : vector<8x512xf32>
    %121 = tpu.matmul %118, %0, %cst_29 {dimension_numbers = #tpu.dot_dimension_numbers<[1], [0], [0], [1], [0, 0, 1, 1], [], []>} : vector<8x128xf32>, vector<128x512xf32>, vector<8x512xf32> -> vector<8x512xf32>
    %122 = arith.addf %120, %121 : vector<8x512xf32>
    %123 = vector.extract_strided_slice %122 {offsets = [0, 0], sizes = [8, 128], strides = [1, 1]} : vector<8x512xf32> to vector<8x128xf32>
    %124 = arith.negf %123 : vector<8x128xf32>
    %125 = math.exp %124 : vector<8x128xf32>
    %cst_30 = arith.constant 1.000000e+00 : f32
    %126 = vector.broadcast %cst_30 : f32 to vector<8x128xf32>
    %127 = arith.addf %126, %125 : vector<8x128xf32>
    %128 = arith.divf %126, %127 : vector<8x128xf32>
    %129 = vector.extract_strided_slice %122 {offsets = [0, 128], sizes = [8, 128], strides = [1, 1]} : vector<8x512xf32> to vector<8x128xf32>
    %130 = arith.negf %129 : vector<8x128xf32>
    %131 = math.exp %130 : vector<8x128xf32>
    %cst_31 = arith.constant 1.000000e+00 : f32
    %132 = vector.broadcast %cst_31 : f32 to vector<8x128xf32>
    %133 = arith.addf %132, %131 : vector<8x128xf32>
    %134 = arith.divf %132, %133 : vector<8x128xf32>
    %135 = vector.extract_strided_slice %122 {offsets = [0, 256], sizes = [8, 128], strides = [1, 1]} : vector<8x512xf32> to vector<8x128xf32>
    %136 = math.tanh %135 : vector<8x128xf32>
    %137 = vector.extract_strided_slice %122 {offsets = [0, 384], sizes = [8, 128], strides = [1, 1]} : vector<8x512xf32> to vector<8x128xf32>
    %138 = arith.negf %137 : vector<8x128xf32>
    %139 = math.exp %138 : vector<8x128xf32>
    %cst_32 = arith.constant 1.000000e+00 : f32
    %140 = vector.broadcast %cst_32 : f32 to vector<8x128xf32>
    %141 = arith.addf %140, %139 : vector<8x128xf32>
    %142 = arith.divf %140, %141 : vector<8x128xf32>
    %143 = arith.mulf %134, %116 : vector<8x128xf32>
    %144 = arith.mulf %128, %136 : vector<8x128xf32>
    %145 = arith.addf %143, %144 : vector<8x128xf32>
    %146 = math.tanh %145 : vector<8x128xf32>
    %147 = arith.mulf %142, %146 : vector<8x128xf32>
    %c5 = arith.constant 5 : index
    %c0_33 = arith.constant 0 : index
    %c0_34 = arith.constant 0 : index
    %148 = vector.load %arg1[%c5, %c0_33, %c0_34] : memref<8x8x512xf32, #tpu.memory_space<vmem>>, vector<1x8x512xf32>
    %149 = vector.shape_cast %148 : vector<1x8x512xf32> to vector<8x512xf32>
    %cst_35 = arith.constant dense<0.000000e+00> : vector<8x512xf32>
    %150 = tpu.matmul %147, %0, %cst_35 {dimension_numbers = #tpu.dot_dimension_numbers<[1], [0], [0], [1], [0, 0, 1, 1], [], []>} : vector<8x128xf32>, vector<128x512xf32>, vector<8x512xf32> -> vector<8x512xf32>
    %151 = arith.addf %149, %150 : vector<8x512xf32>
    %152 = vector.extract_strided_slice %151 {offsets = [0, 0], sizes = [8, 128], strides = [1, 1]} : vector<8x512xf32> to vector<8x128xf32>
    %153 = arith.negf %152 : vector<8x128xf32>
    %154 = math.exp %153 : vector<8x128xf32>
    %cst_36 = arith.constant 1.000000e+00 : f32
    %155 = vector.broadcast %cst_36 : f32 to vector<8x128xf32>
    %156 = arith.addf %155, %154 : vector<8x128xf32>
    %157 = arith.divf %155, %156 : vector<8x128xf32>
    %158 = vector.extract_strided_slice %151 {offsets = [0, 128], sizes = [8, 128], strides = [1, 1]} : vector<8x512xf32> to vector<8x128xf32>
    %159 = arith.negf %158 : vector<8x128xf32>
    %160 = math.exp %159 : vector<8x128xf32>
    %cst_37 = arith.constant 1.000000e+00 : f32
    %161 = vector.broadcast %cst_37 : f32 to vector<8x128xf32>
    %162 = arith.addf %161, %160 : vector<8x128xf32>
    %163 = arith.divf %161, %162 : vector<8x128xf32>
    %164 = vector.extract_strided_slice %151 {offsets = [0, 256], sizes = [8, 128], strides = [1, 1]} : vector<8x512xf32> to vector<8x128xf32>
    %165 = math.tanh %164 : vector<8x128xf32>
    %166 = vector.extract_strided_slice %151 {offsets = [0, 384], sizes = [8, 128], strides = [1, 1]} : vector<8x512xf32> to vector<8x128xf32>
    %167 = arith.negf %166 : vector<8x128xf32>
    %168 = math.exp %167 : vector<8x128xf32>
    %cst_38 = arith.constant 1.000000e+00 : f32
    %169 = vector.broadcast %cst_38 : f32 to vector<8x128xf32>
    %170 = arith.addf %169, %168 : vector<8x128xf32>
    %171 = arith.divf %169, %170 : vector<8x128xf32>
    %172 = arith.mulf %163, %145 : vector<8x128xf32>
    %173 = arith.mulf %157, %165 : vector<8x128xf32>
    %174 = arith.addf %172, %173 : vector<8x128xf32>
    %175 = math.tanh %174 : vector<8x128xf32>
    %176 = arith.mulf %171, %175 : vector<8x128xf32>
    %c6 = arith.constant 6 : index
    %c0_39 = arith.constant 0 : index
    %c0_40 = arith.constant 0 : index
    %177 = vector.load %arg1[%c6, %c0_39, %c0_40] : memref<8x8x512xf32, #tpu.memory_space<vmem>>, vector<1x8x512xf32>
    %178 = vector.shape_cast %177 : vector<1x8x512xf32> to vector<8x512xf32>
    %cst_41 = arith.constant dense<0.000000e+00> : vector<8x512xf32>
    %179 = tpu.matmul %176, %0, %cst_41 {dimension_numbers = #tpu.dot_dimension_numbers<[1], [0], [0], [1], [0, 0, 1, 1], [], []>} : vector<8x128xf32>, vector<128x512xf32>, vector<8x512xf32> -> vector<8x512xf32>
    %180 = arith.addf %178, %179 : vector<8x512xf32>
    %181 = vector.extract_strided_slice %180 {offsets = [0, 0], sizes = [8, 128], strides = [1, 1]} : vector<8x512xf32> to vector<8x128xf32>
    %182 = arith.negf %181 : vector<8x128xf32>
    %183 = math.exp %182 : vector<8x128xf32>
    %cst_42 = arith.constant 1.000000e+00 : f32
    %184 = vector.broadcast %cst_42 : f32 to vector<8x128xf32>
    %185 = arith.addf %184, %183 : vector<8x128xf32>
    %186 = arith.divf %184, %185 : vector<8x128xf32>
    %187 = vector.extract_strided_slice %180 {offsets = [0, 128], sizes = [8, 128], strides = [1, 1]} : vector<8x512xf32> to vector<8x128xf32>
    %188 = arith.negf %187 : vector<8x128xf32>
    %189 = math.exp %188 : vector<8x128xf32>
    %cst_43 = arith.constant 1.000000e+00 : f32
    %190 = vector.broadcast %cst_43 : f32 to vector<8x128xf32>
    %191 = arith.addf %190, %189 : vector<8x128xf32>
    %192 = arith.divf %190, %191 : vector<8x128xf32>
    %193 = vector.extract_strided_slice %180 {offsets = [0, 256], sizes = [8, 128], strides = [1, 1]} : vector<8x512xf32> to vector<8x128xf32>
    %194 = math.tanh %193 : vector<8x128xf32>
    %195 = vector.extract_strided_slice %180 {offsets = [0, 384], sizes = [8, 128], strides = [1, 1]} : vector<8x512xf32> to vector<8x128xf32>
    %196 = arith.negf %195 : vector<8x128xf32>
    %197 = math.exp %196 : vector<8x128xf32>
    %cst_44 = arith.constant 1.000000e+00 : f32
    %198 = vector.broadcast %cst_44 : f32 to vector<8x128xf32>
    %199 = arith.addf %198, %197 : vector<8x128xf32>
    %200 = arith.divf %198, %199 : vector<8x128xf32>
    %201 = arith.mulf %192, %174 : vector<8x128xf32>
    %202 = arith.mulf %186, %194 : vector<8x128xf32>
    %203 = arith.addf %201, %202 : vector<8x128xf32>
    %204 = math.tanh %203 : vector<8x128xf32>
    %205 = arith.mulf %200, %204 : vector<8x128xf32>
    %c7 = arith.constant 7 : index
    %c0_45 = arith.constant 0 : index
    %c0_46 = arith.constant 0 : index
    %206 = vector.load %arg1[%c7, %c0_45, %c0_46] : memref<8x8x512xf32, #tpu.memory_space<vmem>>, vector<1x8x512xf32>
    %207 = vector.shape_cast %206 : vector<1x8x512xf32> to vector<8x512xf32>
    %cst_47 = arith.constant dense<0.000000e+00> : vector<8x512xf32>
    %208 = tpu.matmul %205, %0, %cst_47 {dimension_numbers = #tpu.dot_dimension_numbers<[1], [0], [0], [1], [0, 0, 1, 1], [], []>} : vector<8x128xf32>, vector<128x512xf32>, vector<8x512xf32> -> vector<8x512xf32>
    %209 = arith.addf %207, %208 : vector<8x512xf32>
    %210 = vector.extract_strided_slice %209 {offsets = [0, 0], sizes = [8, 128], strides = [1, 1]} : vector<8x512xf32> to vector<8x128xf32>
    %211 = arith.negf %210 : vector<8x128xf32>
    %212 = math.exp %211 : vector<8x128xf32>
    %cst_48 = arith.constant 1.000000e+00 : f32
    %213 = vector.broadcast %cst_48 : f32 to vector<8x128xf32>
    %214 = arith.addf %213, %212 : vector<8x128xf32>
    %215 = arith.divf %213, %214 : vector<8x128xf32>
    %216 = vector.extract_strided_slice %209 {offsets = [0, 128], sizes = [8, 128], strides = [1, 1]} : vector<8x512xf32> to vector<8x128xf32>
    %217 = arith.negf %216 : vector<8x128xf32>
    %218 = math.exp %217 : vector<8x128xf32>
    %cst_49 = arith.constant 1.000000e+00 : f32
    %219 = vector.broadcast %cst_49 : f32 to vector<8x128xf32>
    %220 = arith.addf %219, %218 : vector<8x128xf32>
    %221 = arith.divf %219, %220 : vector<8x128xf32>
    %222 = vector.extract_strided_slice %209 {offsets = [0, 256], sizes = [8, 128], strides = [1, 1]} : vector<8x512xf32> to vector<8x128xf32>
    %223 = math.tanh %222 : vector<8x128xf32>
    %224 = vector.extract_strided_slice %209 {offsets = [0, 384], sizes = [8, 128], strides = [1, 1]} : vector<8x512xf32> to vector<8x128xf32>
    %225 = arith.negf %224 : vector<8x128xf32>
    %226 = math.exp %225 : vector<8x128xf32>
    %cst_50 = arith.constant 1.000000e+00 : f32
    %227 = vector.broadcast %cst_50 : f32 to vector<8x128xf32>
    %228 = arith.addf %227, %226 : vector<8x128xf32>
    %229 = arith.divf %227, %228 : vector<8x128xf32>
    %230 = arith.mulf %221, %203 : vector<8x128xf32>
    %231 = arith.mulf %215, %223 : vector<8x128xf32>
    %232 = arith.addf %230, %231 : vector<8x128xf32>
    %233 = math.tanh %232 : vector<8x128xf32>
    %234 = arith.mulf %229, %233 : vector<8x128xf32>
    %cst_51 = arith.constant 0.000000e+00 : f32
    %235 = vector.broadcast %cst_51 : f32 to vector<8x128xf32>
    %236 = arith.maximumf %234, %235 : vector<8x128xf32>
    %c0_52 = arith.constant 0 : index
    %c0_53 = arith.constant 0 : index
    %237 = vector.load %arg3[%c0_52, %c0_53] : memref<1x128xf32, #tpu.memory_space<vmem>>, vector<1x128xf32>
    %238 = vector.broadcast %237 : vector<1x128xf32> to vector<8x128xf32>
    %239 = arith.mulf %236, %238 : vector<8x128xf32>
    %cst_54 = arith.constant dense<0.000000e+00> : vector<8xf32>
    %240 = vector.multi_reduction <add>, %239, %cst_54 [1] : vector<8x128xf32> to vector<8xf32>
    %241 = vector.shape_cast %240 : vector<8xf32> to vector<8x1xf32>
    %c0_55 = arith.constant 0 : index
    %c0_56 = arith.constant 0 : index
    %242 = vector.load %arg4[%c0_55, %c0_56] : memref<1x1xf32, #tpu.memory_space<vmem>>, vector<1x1xf32>
    %243 = vector.broadcast %242 : vector<1x1xf32> to vector<8x1xf32>
    %244 = arith.addf %241, %243 : vector<8x1xf32>
    %c0_57 = arith.constant 0 : index
    %c0_58 = arith.constant 0 : index
    %245 = vector.load %arg5[%c0_57, %c0_58] : memref<8x1xf32, #tpu.memory_space<vmem>>, vector<8x1xf32>
    tpu.vector_store %arg5[%c0_57, %c0_58], %244 {strides = array<i32>} : memref<8x1xf32, #tpu.memory_space<vmem>>, vector<8x1xf32>,
    return
  }
  func.func @transform_0(%arg0: i32) -> (i32, i32, i32) {
    %c0_i32 = arith.constant 0 : i32
    %c0_i32_0 = arith.constant 0 : i32
    %c0_i32_1 = arith.constant 0 : i32
    return %c0_i32, %arg0, %c0_i32_0 : i32, i32, i32
  }
  func.func @transform_1(%arg0: i32) -> (i32, i32) {
    %c0_i32 = arith.constant 0 : i32
    %c0_i32_0 = arith.constant 0 : i32
    %c0_i32_1 = arith.constant 0 : i32
    return %c0_i32, %c0_i32_0 : i32, i32
  }
  func.func @transform_2(%arg0: i32) -> (i32, i32) {
    %c0_i32 = arith.constant 0 : i32
    %c0_i32_0 = arith.constant 0 : i32
    %c0_i32_1 = arith.constant 0 : i32
    return %c0_i32, %c0_i32_0 : i32, i32
  }
  func.func @transform_3(%arg0: i32) -> (i32, i32) {
    %c0_i32 = arith.constant 0 : i32
    %c0_i32_0 = arith.constant 0 : i32
    %c0_i32_1 = arith.constant 0 : i32
    return %c0_i32, %c0_i32_0 : i32, i32
  }
  func.func @transform_4(%arg0: i32) -> (i32, i32) {
    %c0_i32 = arith.constant 0 : i32
    %c0_i32_0 = arith.constant 0 : i32
    return %arg0, %c0_i32 : i32, i32
  }
}

</mosaic_0001>

<llo_original>
// kernel: tpu_custom_call.1
$region0: #{tpu_custom_call.1}
  #allocation0 [shape = 'u32[]', space=smem, size = 0x4, offset = 0x4, fixed_abs, tag = 'smem constant byte address 0x4 - core index']
  #allocation1 [shape = 'u32[144,128]{1,0:T(1,128)}', space=vmem, size = 0x12000, scoped, tag = 'internal scratch']
  #allocation2 [shape = 'f32[1,1]{1,0:T(1,128)S(1)}', space=vmem, size = 0x200, scoped, tag = 'scoped memory for tpu_custom_call.1']
  %s0 = inlined_call_operand.hbm [shape: f32[8,8,512], index: 0, kind: input, shape index: {}]
  %s1 = inlined_call_operand.hbm [shape: f32[128,512], index: 1, kind: input, shape index: {}]
  %s2 = inlined_call_operand.vmem [shape: f32[1,128], index: 2, kind: input, shape index: {}]
  %s3 = inlined_call_operand.<no memory space> [shape: f32[1,1], index: 3, kind: input, shape index: {}]
  %s4 = inlined_call_operand.vmem [shape: f32[8,1], index: 4, kind: output, shape index: {}]
  %s5 = sld [smem:[#allocation0]]
  $region34: #{tpu_custom_call.1} parent=0
    _
  %s7 = ssub.s32 1, %s5
  %s8 = scalar_select 0, %s7, %s5
  %v9 = vstv %s3
  %10 = vst [vmem:[#allocation2] sm:$0x1] %v9
  $region1: #{tpu_custom_call.1} parent=0
    #allocation3 [shape = 'u8[131072]{0}', space=vmem, size = 0x20000, scoped, tag = 'input window, operand 0, single buffered']
    #allocation4 [shape = 's32[1]{0}', space=sflag, size = 0x4, scoped, tag = 'scoped memory for tpu_custom_call.1']
    #allocation5 [shape = 'u8[262144]{0}', space=vmem, size = 0x40000, scoped, tag = 'input window, operand 1, single buffered']
    #allocation6 [shape = 's32[1]{0}', space=sflag, size = 0x4, scoped, tag = 'scoped memory for tpu_custom_call.1']
    %11 = vsyncpa [#allocation4], 0
    %12 = vsyncpa [#allocation6], 0
    // Predicated region
    $region2: #{tpu_custom_call.1} parent=1 // pred_check
      _
    $region3: #{tpu_custom_call.1} parent=1 // pred_check_branch
      %14 = sbr.rel (0) target = $region5
    $region4: #{tpu_custom_call.1} parent=1 // pred_region
      %s16 = ssub.s32 4096, 4096
      %17 = vsyncadd [#allocation4], %s16
      %s18 = sshll.u32 [#allocation3], 4
      %s19 = int_to_ptr.vmem [resolvable:$true] %s18
      %24 = dma.hbm_to_vmem [thread:$0]  %s0, 4096, %s19, [#allocation4], 512, 512, 32
    $region5: #{tpu_custom_call.1} parent=1 // pred_fallthru
      _
    // Predicated region
    $region6: #{tpu_custom_call.1} parent=1 // pred_check
      _
    $region7: #{tpu_custom_call.1} parent=1 // pred_check_branch
      %26 = sbr.rel (0) target = $region9
    $region8: #{tpu_custom_call.1} parent=1 // pred_region
      %s28 = ssub.s32 8192, 8192
      %29 = vsyncadd [#allocation6], %s28
      %s30 = sshll.u32 [#allocation5], 4
      %s31 = int_to_ptr.vmem [resolvable:$true] %s30
      %36 = dma.hbm_to_vmem [thread:$0]  %s1, 8192, %s31, [#allocation6], 512, 512, 32
    $region9: #{tpu_custom_call.1} parent=1 // pred_fallthru
      _
    // Predicated region
    $region10: #{tpu_custom_call.1} parent=1 // pred_check
      _
    $region11: #{tpu_custom_call.1} parent=1 // pred_check_branch
      %38 = sbr.rel (0) target = $region13
    $region12: #{tpu_custom_call.1} parent=1 // pred_region
      _
    $region13: #{tpu_custom_call.1} parent=1 // pred_fallthru
      _
    // Predicated region
    $region14: #{tpu_custom_call.1} parent=1 // pred_check
      _
    $region15: #{tpu_custom_call.1} parent=1 // pred_check_branch
      %40 = sbr.rel (0) target = $region17
    $region16: #{tpu_custom_call.1} parent=1 // pred_region
      _
    $region17: #{tpu_custom_call.1} parent=1 // pred_fallthru
      _
    // Predicated region
    $region18: #{tpu_custom_call.1} parent=1 // pred_check
      _
    $region19: #{tpu_custom_call.1} parent=1 // pred_check_branch
      %42 = sbr.rel (0) target = $region21
    $region20: #{tpu_custom_call.1} parent=1 // pred_region
      %43 = dma.done [#allocation4], 4096
    $region21: #{tpu_custom_call.1} parent=1 // pred_fallthru
      _
    // Predicated region
    $region22: #{tpu_custom_call.1} parent=1 // pred_check
      _
    $region23: #{tpu_custom_call.1} parent=1 // pred_check_branch
      %45 = sbr.rel (0) target = $region25
    $region24: #{tpu_custom_call.1} parent=1 // pred_region
      %46 = dma.done [#allocation6], 8192
    $region25: #{tpu_custom_call.1} parent=1 // pred_fallthru
      _
    %v47 = vld [vmem:[#allocation5] sm:$0xff]
    %v48 = vld [vmem:[#allocation5 + $0x8] sm:$0xff]
    %v49 = vld [vmem:[#allocation5 + $0x10] sm:$0xff]
    %v50 = vld [vmem:[#allocation5 + $0x18] sm:$0xff]
    %v51 = vld [vmem:[#allocation5 + $0x20] sm:$0xff]
    %v52 = vld [vmem:[#allocation5 + $0x28] sm:$0xff]
    %v53 = vld [vmem:[#allocation5 + $0x30] sm:$0xff]
    %v54 = vld [vmem:[#allocation5 + $0x38] sm:$0xff]
    %v55 = vld [vmem:[#allocation5 + $0x40] sm:$0xff]
    %v56 = vld [vmem:[#allocation5 + $0x48] sm:$0xff]
    %v57 = vld [vmem:[#allocation5 + $0x50] sm:$0xff]
    %v58 = vld [vmem:[#allocation5 + $0x58] sm:$0xff]
    %v59 = vld [vmem:[#allocation5 + $0x60] sm:$0xff]
    %v60 = vld [vmem:[#allocation5 + $0x68] sm:$0xff]
    %v61 = vld [vmem:[#allocation5 + $0x70] sm:$0xff]
    %v62 = vld [vmem:[#allocation5 + $0x78] sm:$0xff]
    %v63 = vld [vmem:[#allocation5 + $0x80] sm:$0xff]
    %v64 = vld [vmem:[#allocation5 + $0x88] sm:$0xff]
    %v65 = vld [vmem:[#allocation5 + $0x90] sm:$0xff]
    %v66 = vld [vmem:[#allocation5 + $0x98] sm:$0xff]
    %v67 = vld [vmem:[#allocation5 + $0xa0] sm:$0xff]
    %v68 = vld [vmem:[#allocation5 + $0xa8] sm:$0xff]
    %v69 = vld [vmem:[#allocation5 + $0xb0] sm:$0xff]
    %v70 = vld [vmem:[#allocation5 + $0xb8] sm:$0xff]
    %v71 = vld [vmem:[#allocation5 + $0xc0] sm:$0xff]
    %v72 = vld [vmem:[#allocation5 + $0xc8] sm:$0xff]
    %v73 = vld [vmem:[#allocation5 + $0xd0] sm:$0xff]
    %v74 = vld [vmem:[#allocation5 + $0xd8] sm:$0xff]
    %v75 = vld [vmem:[#allocation5 + $0xe0] sm:$0xff]
    %v76 = vld [vmem:[#allocation5 + $0xe8] sm:$0xff]
    %v77 = vld [vmem:[#allocation5 + $0xf0] sm:$0xff]
    %v78 = vld [vmem:[#allocation5 + $0xf8] sm:$0xff]
    %v79 = vld [vmem:[#allocation5 + $0x100] sm:$0xff]
    %v80 = vld [vmem:[#allocation5 + $0x108] sm:$0xff]
    %v81 = vld [vmem:[#allocation5 + $0x110] sm:$0xff]
    %v82 = vld [vmem:[#allocation5 + $0x118] sm:$0xff]
    %v83 = vld [vmem:[#allocation5 + $0x120] sm:$0xff]
    %v84 = vld [vmem:[#allocation5 + $0x128] sm:$0xff]
    %v85 = vld [vmem:[#allocation5 + $0x130] sm:$0xff]
    %v86 = vld [vmem:[#allocation5 + $0x138] sm:$0xff]
    %v87 = vld [vmem:[#allocation5 + $0x140] sm:$0xff]
    %v88 = vld [vmem:[#allocation5 + $0x148] sm:$0xff]
    %v89 = vld [vmem:[#allocation5 + $0x150] sm:$0xff]
    %v90 = vld [vmem:[#allocation5 + $0x158] sm:$0xff]
    %v91 = vld [vmem:[#allocation5 + $0x160] sm:$0xff]
    %v92 = vld [vmem:[#allocation5 + $0x168] sm:$0xff]
    %v93 = vld [vmem:[#allocation5 + $0x170] sm:$0xff]
    %v94 = vld [vmem:[#allocation5 + $0x178] sm:$0xff]
    %v95 = vld [vmem:[#allocation5 + $0x180] sm:$0xff]
    %v96 = vld [vmem:[#allocation5 + $0x188] sm:$0xff]
    %v97 = vld [vmem:[#allocation5 + $0x190] sm:$0xff]
    %v98 = vld [vmem:[#allocation5 + $0x198] sm:$0xff]
    %v99 = vld [vmem:[#allocation5 + $0x1a0] sm:$0xff]
    %v100 = vld [vmem:[#allocation5 + $0x1a8] sm:$0xff]
    %v101 = vld [vmem:[#allocation5 + $0x1b0] sm:$0xff]
    %v102 = vld [vmem:[#allocation5 + $0x1b8] sm:$0xff]
    %v103 = vld [vmem:[#allocation5 + $0x1c0] sm:$0xff]
    %v104 = vld [vmem:[#allocation5 + $0x1c8] sm:$0xff]
    %v105 = vld [vmem:[#allocation5 + $0x1d0] sm:$0xff]
    %v106 = vld [vmem:[#allocation5 + $0x1d8] sm:$0xff]
    %v107 = vld [vmem:[#allocation5 + $0x1e0] sm:$0xff]
    %v108 = vld [vmem:[#allocation5 + $0x1e8] sm:$0xff]
    %v109 = vld [vmem:[#allocation5 + $0x1f0] sm:$0xff]
    %v110 = vld [vmem:[#allocation5 + $0x1f8] sm:$0xff]
    %v111 = vld [vmem:[#allocation3] sm:$0xff]
    %v112 = vld [vmem:[#allocation3 + $0x8] sm:$0xff]
    %v113 = vld [vmem:[#allocation3 + $0x10] sm:$0xff]
    %v114 = vld [vmem:[#allocation3 + $0x18] sm:$0xff]
    %115 = vmatprep.subr.mxu0 %v48
    %116 = vmatpush1.msra.mxu0 %v47
    %117 = vmatprep.subr.mxu0 %v52
    %118 = vmatpush1.msra.mxu0 %v51
    %119 = vmatprep.subr.mxu0 %v56
    %120 = vmatpush1.msra.mxu0 %v55
    %121 = vmatprep.subr.mxu0 %v60
    %122 = vmatpush1.msra.mxu0 %v59
    %123 = vmatprep.subr.mxu0 %v64
    %124 = vmatpush1.msra.mxu0 %v63
    %125 = vmatprep.subr.mxu0 %v68
    %126 = vmatpush1.msra.mxu0 %v67
    %127 = vmatprep.subr.mxu0 %v72
    %128 = vmatpush1.msra.mxu0 %v71
    %129 = vmatprep.subr.mxu0 %v76
    %130 = vmatpush1.msra.mxu0 %v75
    %131 = vmatprep.subr.mxu0 %v80
    %132 = vmatpush1.msra.mxu0 %v79
    %133 = vmatprep.subr.mxu0 %v84
    %134 = vmatpush1.msra.mxu0 %v83
    %135 = vmatprep.subr.mxu0 %v88
    %136 = vmatpush1.msra.mxu0 %v87
    %137 = vmatprep.subr.mxu0 %v92
    %138 = vmatpush1.msra.mxu0 %v91
    %139 = vmatprep.subr.mxu0 %v96
    %140 = vmatpush1.msra.mxu0 %v95
    %141 = vmatprep.subr.mxu0 %v100
    %142 = vmatpush1.msra.mxu0 %v99
    %143 = vmatprep.subr.mxu0 %v104
    %144 = vmatpush1.msra.mxu0 %v103
    %145 = vmatprep.subr.mxu0 %v108
    %146 = vmatpush1.msra.mxu0 %v107
    %147 = vmatprep.subr.mxu0 0.0
    %148 = vmatpush1.msra.mxu0 0.0
    %149 = vmatprep.subr.mxu0 0.0
    %150 = vmatpush1.msra.mxu0 0.0
    %151 = vmatprep.subr.mxu0 0.0
    %152 = vmatpush1.msra.mxu0 0.0
    %153 = vmatprep.subr.mxu0 0.0
    %154 = vmatpush1.msra.mxu0 0.0
    %155 = vmatprep.subr.mxu0 0.0
    %156 = vmatpush1.msra.mxu0 0.0
    %157 = vmatprep.subr.mxu0 0.0
    %158 = vmatpush1.msra.mxu0 0.0
    %159 = vmatprep.subr.mxu0 0.0
    %160 = vmatpush1.msra.mxu0 0.0
    %161 = vmatprep.subr.mxu0 0.0
    %162 = vmatpush1.msra.mxu0 0.0
    %163 = vmatprep.subr.mxu0 0.0
    %164 = vmatpush1.msra.mxu0 0.0
    %165 = vmatprep.subr.mxu0 0.0
    %166 = vmatpush1.msra.mxu0 0.0
    %167 = vmatprep.subr.mxu0 0.0
    %168 = vmatpush1.msra.mxu0 0.0
    %169 = vmatprep.subr.mxu0 0.0
    %170 = vmatpush1.msra.mxu0 0.0
    %171 = vmatprep.subr.mxu0 0.0
    %172 = vmatpush1.msra.mxu0 0.0
    %173 = vmatprep.subr.mxu0 0.0
    %174 = vmatpush1.msra.mxu0 0.0
    %175 = vmatprep.subr.mxu0 0.0
    %176 = vmatpush1.msra.mxu0 0.0
    %177 = vmatprep.subr.mxu0 0.0
    %178 = vmatpush1.msra.mxu0 0.0
    %179 = vmatprep.mubr.f32.mxu0 0.0
    %180 = vmatmul.mubr.f32.gmra.mrb[0].mxu0 0.0
    %v181 = vpop.f32.mrb[0].mxu0
    %v182 = vadd.f32 0.0, %v181
    %v183 = vpop.f32.mrb[0].mxu0
    %v184 = vadd.f32 0.0, %v183
    %185 = vdwg.mxu0
    %186 = vmatprep.subr.mxu0 %v50
    %187 = vmatpush1.msra.mxu0 %v49
    %188 = vmatprep.subr.mxu0 %v54
    %189 = vmatpush1.msra.mxu0 %v53
    %190 = vmatprep.subr.mxu0 %v58
    %191 = vmatpush1.msra.mxu0 %v57
    %192 = vmatprep.subr.mxu0 %v62
    %193 = vmatpush1.msra.mxu0 %v61
    %194 = vmatprep.subr.mxu0 %v66
    %195 = vmatpush1.msra.mxu0 %v65
    %196 = vmatprep.subr.mxu0 %v70
    %197 = vmatpush1.msra.mxu0 %v69
    %198 = vmatprep.subr.mxu0 %v74
    %199 = vmatpush1.msra.mxu0 %v73
    %200 = vmatprep.subr.mxu0 %v78
    %201 = vmatpush1.msra.mxu0 %v77
    %202 = vmatprep.subr.mxu0 %v82
    %203 = vmatpush1.msra.mxu0 %v81
    %204 = vmatprep.subr.mxu0 %v86
    %205 = vmatpush1.msra.mxu0 %v85
    %206 = vmatprep.subr.mxu0 %v90
    %207 = vmatpush1.msra.mxu0 %v89
    %208 = vmatprep.subr.mxu0 %v94
    %209 = vmatpush1.msra.mxu0 %v93
    %210 = vmatprep.subr.mxu0 %v98
    %211 = vmatpush1.msra.mxu0 %v97
    %212 = vmatprep.subr.mxu0 %v102
    %213 = vmatpush1.msra.mxu0 %v101
    %214 = vmatprep.subr.mxu0 %v106
    %215 = vmatpush1.msra.mxu0 %v105
    %216 = vmatprep.subr.mxu0 %v110
    %217 = vmatpush1.msra.mxu0 %v109
    %218 = vmatprep.subr.mxu0 0.0
    %219 = vmatpush1.msra.mxu0 0.0
    %220 = vmatprep.subr.mxu0 0.0
    %221 = vmatpush1.msra.mxu0 0.0
    %222 = vmatprep.subr.mxu0 0.0
    %223 = vmatpush1.msra.mxu0 0.0
    %224 = vmatprep.subr.mxu0 0.0
    %225 = vmatpush1.msra.mxu0 0.0
    %226 = vmatprep.subr.mxu0 0.0
    %227 = vmatpush1.msra.mxu0 0.0
    %228 = vmatprep.subr.mxu0 0.0
    %229 = vmatpush1.msra.mxu0 0.0
    %230 = vmatprep.subr.mxu0 0.0
    %231 = vmatpush1.msra.mxu0 0.0
    %232 = vmatprep.subr.mxu0 0.0
    %233 = vmatpush1.msra.mxu0 0.0
    %234 = vmatprep.subr.mxu0 0.0
    %235 = vmatpush1.msra.mxu0 0.0
    %236 = vmatprep.subr.mxu0 0.0
    %237 = vmatpush1.msra.mxu0 0.0
    %238 = vmatprep.subr.mxu0 0.0
    %239 = vmatpush1.msra.mxu0 0.0
    %240 = vmatprep.subr.mxu0 0.0
    %241 = vmatpush1.msra.mxu0 0.0
    %242 = vmatprep.subr.mxu0 0.0
    %243 = vmatpush1.msra.mxu0 0.0
    %244 = vmatprep.subr.mxu0 0.0
    %245 = vmatpush1.msra.mxu0 0.0
    %246 = vmatprep.subr.mxu0 0.0
    %247 = vmatpush1.msra.mxu0 0.0
    %248 = vmatprep.subr.mxu0 0.0
    %249 = vmatpush1.msra.mxu0 0.0
    %250 = vmatprep.mubr.f32.mxu0 0.0
    %251 = vmatmul.mubr.f32.gmra.mrb[0].mxu0 0.0
    %v252 = vpop.f32.mrb[0].mxu0
    %v253 = vadd.f32 0.0, %v252
    %v254 = vpop.f32.mrb[0].mxu0
    %v255 = vadd.f32 0.0, %v254
    %256 = vdwg.mxu0
    %v257 = vadd.f32 %v111, %v182
    %v258 = vadd.f32 %v112, %v184
    %v259 = vadd.f32 %v113, %v253
    %v260 = vadd.f32 %v114, %v255
    %v261 = vxor.u32 %v257, 2147483648
    %v262 = vmul.f32 %v261, 1.442695
    %v263 = vpow.pop %v262
    %v264 = vadd.f32 %v263, 1.0
    %v265 = vrcp.pop %v264
    %v266 = vmul.f32 1.0, %v265
    %v267 = vxor.u32 %v258, 2147483648
    %v268 = vmul.f32 %v267, 1.442695
    %v269 = vpow.pop %v268
    %v270 = vadd.f32 %v269, 1.0
    %v271 = vrcp.pop %v270
    %v272 = vmul.f32 1.0, %v271
    %v273 = vtanh.pop %v259
    %v274 = vxor.u32 %v260, 2147483648
    %v275 = vmul.f32 %v274, 1.442695
    %v276 = vpow.pop %v275
    %v277 = vadd.f32 %v276, 1.0
    %v278 = vrcp.pop %v277
    %v279 = vmul.f32 1.0, %v278
    %v280 = vmul.f32 %v272, 0.0
    %v281 = vmul.f32 %v266, %v273
    %v282 = vadd.f32 %v280, %v281
    %v283 = vtanh.pop %v282
    %v284 = vmul.f32 %v279, %v283
    %s285 = scalar_lea.vmem [#allocation3], 32
    %v286 = vld [vmem:[%s285] sm:$0xff]
    %v287 = vld [vmem:[%s285 + $0x8] sm:$0xff]
    %v288 = vld [vmem:[%s285 + $0x10] sm:$0xff]
    %v289 = vld [vmem:[%s285 + $0x18] sm:$0xff]
    %290 = vmatprep.subr.mxu0 %v48
    %291 = vmatpush1.msra.mxu0 %v47
    %292 = vmatprep.subr.mxu0 %v52
    %293 = vmatpush1.msra.mxu0 %v51
    %294 = vmatprep.subr.mxu0 %v56
    %295 = vmatpush1.msra.mxu0 %v55
    %296 = vmatprep.subr.mxu0 %v60
    %297 = vmatpush1.msra.mxu0 %v59
    %298 = vmatprep.subr.mxu0 %v64
    %299 = vmatpush1.msra.mxu0 %v63
    %300 = vmatprep.subr.mxu0 %v68
    %301 = vmatpush1.msra.mxu0 %v67
    %302 = vmatprep.subr.mxu0 %v72
    %303 = vmatpush1.msra.mxu0 %v71
    %304 = vmatprep.subr.mxu0 %v76
    %305 = vmatpush1.msra.mxu0 %v75
    %306 = vmatprep.subr.mxu0 %v80
    %307 = vmatpush1.msra.mxu0 %v79
    %308 = vmatprep.subr.mxu0 %v84
    %309 = vmatpush1.msra.mxu0 %v83
    %310 = vmatprep.subr.mxu0 %v88
    %311 = vmatpush1.msra.mxu0 %v87
    %312 = vmatprep.subr.mxu0 %v92
    %313 = vmatpush1.msra.mxu0 %v91
    %314 = vmatprep.subr.mxu0 %v96
    %315 = vmatpush1.msra.mxu0 %v95
    %316 = vmatprep.subr.mxu0 %v100
    %317 = vmatpush1.msra.mxu0 %v99
    %318 = vmatprep.subr.mxu0 %v104
    %319 = vmatpush1.msra.mxu0 %v103
    %320 = vmatprep.subr.mxu0 %v108
    %321 = vmatpush1.msra.mxu0 %v107
    %322 = vmatprep.subr.mxu0 0.0
    %323 = vmatpush1.msra.mxu0 0.0
    %324 = vmatprep.subr.mxu0 0.0
    %325 = vmatpush1.msra.mxu0 0.0
    %326 = vmatprep.subr.mxu0 0.0
    %327 = vmatpush1.msra.mxu0 0.0
    %328 = vmatprep.subr.mxu0 0.0
    %329 = vmatpush1.msra.mxu0 0.0
    %330 = vmatprep.subr.mxu0 0.0
    %331 = vmatpush1.msra.mxu0 0.0
    %332 = vmatprep.subr.mxu0 0.0
    %333 = vmatpush1.msra.mxu0 0.0
    %334 = vmatprep.subr.mxu0 0.0
    %335 = vmatpush1.msra.mxu0 0.0
    %336 = vmatprep.subr.mxu0 0.0
    %337 = vmatpush1.msra.mxu0 0.0
    %338 = vmatprep.subr.mxu0 0.0
    %339 = vmatpush1.msra.mxu0 0.0
    %340 = vmatprep.subr.mxu0 0.0
    %341 = vmatpush1.msra.mxu0 0.0
    %342 = vmatprep.subr.mxu0 0.0
    %343 = vmatpush1.msra.mxu0 0.0
    %344 = vmatprep.subr.mxu0 0.0
    %345 = vmatpush1.msra.mxu0 0.0
    %346 = vmatprep.subr.mxu0 0.0
    %347 = vmatpush1.msra.mxu0 0.0
    %348 = vmatprep.subr.mxu0 0.0
    %349 = vmatpush1.msra.mxu0 0.0
    %350 = vmatprep.subr.mxu0 0.0
    %351 = vmatpush1.msra.mxu0 0.0
    %352 = vmatprep.subr.mxu0 0.0
    %353 = vmatpush1.msra.mxu0 0.0
    %354 = vmatprep.mubr.f32.mxu0 0.0
    %355 = vmatmul.mubr.f32.gmra.mrb[0].mxu0 %v284
    %v356 = vpop.f32.mrb[0].mxu0
    %v357 = vadd.f32 0.0, %v356
    %v358 = vpop.f32.mrb[0].mxu0
    %v359 = vadd.f32 0.0, %v358
    %360 = vdwg.mxu0
    %361 = vmatprep.subr.mxu0 %v50
    %362 = vmatpush1.msra.mxu0 %v49
    %363 = vmatprep.subr.mxu0 %v54
    %364 = vmatpush1.msra.mxu0 %v53
    %365 = vmatprep.subr.mxu0 %v58
    %366 = vmatpush1.msra.mxu0 %v57
    %367 = vmatprep.subr.mxu0 %v62
    %368 = vmatpush1.msra.mxu0 %v61
    %369 = vmatprep.subr.mxu0 %v66
    %370 = vmatpush1.msra.mxu0 %v65
    %371 = vmatprep.subr.mxu0 %v70
    %372 = vmatpush1.msra.mxu0 %v69
    %373 = vmatprep.subr.mxu0 %v74
    %374 = vmatpush1.msra.mxu0 %v73
    %375 = vmatprep.subr.mxu0 %v78
    %376 = vmatpush1.msra.mxu0 %v77
    %377 = vmatprep.subr.mxu0 %v82
    %378 = vmatpush1.msra.mxu0 %v81
    %379 = vmatprep.subr.mxu0 %v86
    %380 = vmatpush1.msra.mxu0 %v85
    %381 = vmatprep.subr.mxu0 %v90
    %382 = vmatpush1.msra.mxu0 %v89
    %383 = vmatprep.subr.mxu0 %v94
    %384 = vmatpush1.msra.mxu0 %v93
    %385 = vmatprep.subr.mxu0 %v98
    %386 = vmatpush1.msra.mxu0 %v97
    %387 = vmatprep.subr.mxu0 %v102
    %388 = vmatpush1.msra.mxu0 %v101
    %389 = vmatprep.subr.mxu0 %v106
    %390 = vmatpush1.msra.mxu0 %v105
    %391 = vmatprep.subr.mxu0 %v110
    %392 = vmatpush1.msra.mxu0 %v109
    %393 = vmatprep.subr.mxu0 0.0
    %394 = vmatpush1.msra.mxu0 0.0
    %395 = vmatprep.subr.mxu0 0.0
    %396 = vmatpush1.msra.mxu0 0.0
    %397 = vmatprep.subr.mxu0 0.0
    %398 = vmatpush1.msra.mxu0 0.0
    %399 = vmatprep.subr.mxu0 0.0
    %400 = vmatpush1.msra.mxu0 0.0
    %401 = vmatprep.subr.mxu0 0.0
    %402 = vmatpush1.msra.mxu0 0.0
    %403 = vmatprep.subr.mxu0 0.0
    %404 = vmatpush1.msra.mxu0 0.0
    %405 = vmatprep.subr.mxu0 0.0
    %406 = vmatpush1.msra.mxu0 0.0
    %407 = vmatprep.subr.mxu0 0.0
    %408 = vmatpush1.msra.mxu0 0.0
    %409 = vmatprep.subr.mxu0 0.0
    %410 = vmatpush1.msra.mxu0 0.0
    %411 = vmatprep.subr.mxu0 0.0
    %412 = vmatpush1.msra.mxu0 0.0
    %413 = vmatprep.subr.mxu0 0.0
    %414 = vmatpush1.msra.mxu0 0.0
    %415 = vmatprep.subr.mxu0 0.0
    %416 = vmatpush1.msra.mxu0 0.0
    %417 = vmatprep.subr.mxu0 0.0
    %418 = vmatpush1.msra.mxu0 0.0
    %419 = vmatprep.subr.mxu0 0.0
    %420 = vmatpush1.msra.mxu0 0.0
    %421 = vmatprep.subr.mxu0 0.0
    %422 = vmatpush1.msra.mxu0 0.0
    %423 = vmatprep.subr.mxu0 0.0
    %424 = vmatpush1.msra.mxu0 0.0
    %425 = vmatprep.mubr.f32.mxu0 0.0
    %426 = vmatmul.mubr.f32.gmra.mrb[0].mxu0 %v284
    %v427 = vpop.f32.mrb[0].mxu0
    %v428 = vadd.f32 0.0, %v427
    %v429 = vpop.f32.mrb[0].mxu0
    %v430 = vadd.f32 0.0, %v429
    %431 = vdwg.mxu0
    %v432 = vadd.f32 %v286, %v357
    %v433 = vadd.f32 %v287, %v359
    %v434 = vadd.f32 %v288, %v428
    %v435 = vadd.f32 %v289, %v430
    %v436 = vxor.u32 %v432, 2147483648
    %v437 = vmul.f32 %v436, 1.442695
    %v438 = vpow.pop %v437
    %v439 = vadd.f32 %v438, 1.0
    %v440 = vrcp.pop %v439
    %v441 = vmul.f32 1.0, %v440
    %v442 = vxor.u32 %v433, 2147483648
    %v443 = vmul.f32 %v442, 1.442695
    %v444 = vpow.pop %v443
    %v445 = vadd.f32 %v444, 1.0
    %v446 = vrcp.pop %v445
    %v447 = vmul.f32 1.0, %v446
    %v448 = vtanh.pop %v434
    %v449 = vxor.u32 %v435, 2147483648
    %v450 = vmul.f32 %v449, 1.442695
    %v451 = vpow.pop %v450
    %v452 = vadd.f32 %v451, 1.0
    %v453 = vrcp.pop %v452
    %v454 = vmul.f32 1.0, %v453
    %v455 = vmul.f32 %v447, %v282
    %v456 = vmul.f32 %v441, %v448
    %v457 = vadd.f32 %v455, %v456
    %v458 = vtanh.pop %v457
    %v459 = vmul.f32 %v454, %v458
    %s460 = scalar_lea.vmem [#allocation3], 64
    %v461 = vld [vmem:[%s460] sm:$0xff]
    %v462 = vld [vmem:[%s460 + $0x8] sm:$0xff]
    %v463 = vld [vmem:[%s460 + $0x10] sm:$0xff]
    %v464 = vld [vmem:[%s460 + $0x18] sm:$0xff]
    %465 = vmatprep.subr.mxu0 %v48
    %466 = vmatpush1.msra.mxu0 %v47
    %467 = vmatprep.subr.mxu0 %v52
    %468 = vmatpush1.msra.mxu0 %v51
    %469 = vmatprep.subr.mxu0 %v56
    %470 = vmatpush1.msra.mxu0 %v55
    %471 = vmatprep.subr.mxu0 %v60
    %472 = vmatpush1.msra.mxu0 %v59
    %473 = vmatprep.subr.mxu0 %v64
    %474 = vmatpush1.msra.mxu0 %v63
    %475 = vmatprep.subr.mxu0 %v68
    %476 = vmatpush1.msra.mxu0 %v67
    %477 = vmatprep.subr.mxu0 %v72
    %478 = vmatpush1.msra.mxu0 %v71
    %479 = vmatprep.subr.mxu0 %v76
    %480 = vmatpush1.msra.mxu0 %v75
    %481 = vmatprep.subr.mxu0 %v80
    %482 = vmatpush1.msra.mxu0 %v79
    %483 = vmatprep.subr.mxu0 %v84
    %484 = vmatpush1.msra.mxu0 %v83
    %485 = vmatprep.subr.mxu0 %v88
    %486 = vmatpush1.msra.mxu0 %v87
    %487 = vmatprep.subr.mxu0 %v92
    %488 = vmatpush1.msra.mxu0 %v91
    %489 = vmatprep.subr.mxu0 %v96
    %490 = vmatpush1.msra.mxu0 %v95
    %491 = vmatprep.subr.mxu0 %v100
    %492 = vmatpush1.msra.mxu0 %v99
    %493 = vmatprep.subr.mxu0 %v104
    %494 = vmatpush1.msra.mxu0 %v103
    %495 = vmatprep.subr.mxu0 %v108
    %496 = vmatpush1.msra.mxu0 %v107
    %497 = vmatprep.subr.mxu0 0.0
    %498 = vmatpush1.msra.mxu0 0.0
    %499 = vmatprep.subr.mxu0 0.0
    %500 = vmatpush1.msra.mxu0 0.0
    %501 = vmatprep.subr.mxu0 0.0
    %502 = vmatpush1.msra.mxu0 0.0
    %503 = vmatprep.subr.mxu0 0.0
    %504 = vmatpush1.msra.mxu0 0.0
    %505 = vmatprep.subr.mxu0 0.0
    %506 = vmatpush1.msra.mxu0 0.0
    %507 = vmatprep.subr.mxu0 0.0
    %508 = vmatpush1.msra.mxu0 0.0
    %509 = vmatprep.subr.mxu0 0.0
    %510 = vmatpush1.msra.mxu0 0.0
    %511 = vmatprep.subr.mxu0 0.0
    %512 = vmatpush1.msra.mxu0 0.0
    %513 = vmatprep.subr.mxu0 0.0
    %514 = vmatpush1.msra.mxu0 0.0
    %515 = vmatprep.subr.mxu0 0.0
    %516 = vmatpush1.msra.mxu0 0.0
    %517 = vmatprep.subr.mxu0 0.0
    %518 = vmatpush1.msra.mxu0 0.0
    %519 = vmatprep.subr.mxu0 0.0
    %520 = vmatpush1.msra.mxu0 0.0
    %521 = vmatprep.subr.mxu0 0.0
    %522 = vmatpush1.msra.mxu0 0.0
    %523 = vmatprep.subr.mxu0 0.0
    %524 = vmatpush1.msra.mxu0 0.0
    %525 = vmatprep.subr.mxu0 0.0
    %526 = vmatpush1.msra.mxu0 0.0
    %527 = vmatprep.subr.mxu0 0.0
    %528 = vmatpush1.msra.mxu0 0.0
    %529 = vmatprep.mubr.f32.mxu0 0.0
    %530 = vmatmul.mubr.f32.gmra.mrb[0].mxu0 %v459
    %v531 = vpop.f32.mrb[0].mxu0
    %v532 = vadd.f32 0.0, %v531
    %v533 = vpop.f32.mrb[0].mxu0
    %v534 = vadd.f32 0.0, %v533
    %535 = vdwg.mxu0
    %536 = vmatprep.subr.mxu0 %v50
    %537 = vmatpush1.msra.mxu0 %v49
    %538 = vmatprep.subr.mxu0 %v54
    %539 = vmatpush1.msra.mxu0 %v53
    %540 = vmatprep.subr.mxu0 %v58
    %541 = vmatpush1.msra.mxu0 %v57
    %542 = vmatprep.subr.mxu0 %v62
    %543 = vmatpush1.msra.mxu0 %v61
    %544 = vmatprep.subr.mxu0 %v66
    %545 = vmatpush1.msra.mxu0 %v65
    %546 = vmatprep.subr.mxu0 %v70
    %547 = vmatpush1.msra.mxu0 %v69
    %548 = vmatprep.subr.mxu0 %v74
    %549 = vmatpush1.msra.mxu0 %v73
    %550 = vmatprep.subr.mxu0 %v78
    %551 = vmatpush1.msra.mxu0 %v77
    %552 = vmatprep.subr.mxu0 %v82
    %553 = vmatpush1.msra.mxu0 %v81
    %554 = vmatprep.subr.mxu0 %v86
    %555 = vmatpush1.msra.mxu0 %v85
    %556 = vmatprep.subr.mxu0 %v90
    %557 = vmatpush1.msra.mxu0 %v89
    %558 = vmatprep.subr.mxu0 %v94
    %559 = vmatpush1.msra.mxu0 %v93
    %560 = vmatprep.subr.mxu0 %v98
    %561 = vmatpush1.msra.mxu0 %v97
    %562 = vmatprep.subr.mxu0 %v102
    %563 = vmatpush1.msra.mxu0 %v101
    %564 = vmatprep.subr.mxu0 %v106
    %565 = vmatpush1.msra.mxu0 %v105
    %566 = vmatprep.subr.mxu0 %v110
    %567 = vmatpush1.msra.mxu0 %v109
    %568 = vmatprep.subr.mxu0 0.0
    %569 = vmatpush1.msra.mxu0 0.0
    %570 = vmatprep.subr.mxu0 0.0
    %571 = vmatpush1.msra.mxu0 0.0
    %572 = vmatprep.subr.mxu0 0.0
    %573 = vmatpush1.msra.mxu0 0.0
    %574 = vmatprep.subr.mxu0 0.0
    %575 = vmatpush1.msra.mxu0 0.0
    %576 = vmatprep.subr.mxu0 0.0
    %577 = vmatpush1.msra.mxu0 0.0
    %578 = vmatprep.subr.mxu0 0.0
    %579 = vmatpush1.msra.mxu0 0.0
    %580 = vmatprep.subr.mxu0 0.0
    %581 = vmatpush1.msra.mxu0 0.0
    %582 = vmatprep.subr.mxu0 0.0
    %583 = vmatpush1.msra.mxu0 0.0
    %584 = vmatprep.subr.mxu0 0.0
    %585 = vmatpush1.msra.mxu0 0.0
    %586 = vmatprep.subr.mxu0 0.0
    %587 = vmatpush1.msra.mxu0 0.0
    %588 = vmatprep.subr.mxu0 0.0
    %589 = vmatpush1.msra.mxu0 0.0
    %590 = vmatprep.subr.mxu0 0.0
    %591 = vmatpush1.msra.mxu0 0.0
    %592 = vmatprep.subr.mxu0 0.0
    %593 = vmatpush1.msra.mxu0 0.0
    %594 = vmatprep.subr.mxu0 0.0
    %595 = vmatpush1.msra.mxu0 0.0
    %596 = vmatprep.subr.mxu0 0.0
    %597 = vmatpush1.msra.mxu0 0.0
    %598 = vmatprep.subr.mxu0 0.0
    %599 = vmatpush1.msra.mxu0 0.0
    %600 = vmatprep.mubr.f32.mxu0 0.0
    %601 = vmatmul.mubr.f32.gmra.mrb[0].mxu0 %v459
    %v602 = vpop.f32.mrb[0].mxu0
    %v603 = vadd.f32 0.0, %v602
    %v604 = vpop.f32.mrb[0].mxu0
    %v605 = vadd.f32 0.0, %v604
    %606 = vdwg.mxu0
    %v607 = vadd.f32 %v461, %v532
    %v608 = vadd.f32 %v462, %v534
    %v609 = vadd.f32 %v463, %v603
    %v610 = vadd.f32 %v464, %v605
    %v611 = vxor.u32 %v607, 2147483648
    %v612 = vmul.f32 %v611, 1.442695
    %v613 = vpow.pop %v612
    %v614 = vadd.f32 %v613, 1.0
    %v615 = vrcp.pop %v614
    %v616 = vmul.f32 1.0, %v615
    %v617 = vxor.u32 %v608, 2147483648
    %v618 = vmul.f32 %v617, 1.442695
    %v619 = vpow.pop %v618
    %v620 = vadd.f32 %v619, 1.0
    %v621 = vrcp.pop %v620
    %v622 = vmul.f32 1.0, %v621
    %v623 = vtanh.pop %v609
    %v624 = vxor.u32 %v610, 2147483648
    %v625 = vmul.f32 %v624, 1.442695
    %v626 = vpow.pop %v625
    %v627 = vadd.f32 %v626, 1.0
    %v628 = vrcp.pop %v627
    %v629 = vmul.f32 1.0, %v628
    %v630 = vmul.f32 %v622, %v457
    %v631 = vmul.f32 %v616, %v623
    %v632 = vadd.f32 %v630, %v631
    %v633 = vtanh.pop %v632
    %v634 = vmul.f32 %v629, %v633
    %s635 = scalar_lea.vmem [#allocation3], 96
    %v636 = vld [vmem:[%s635] sm:$0xff]
    %v637 = vld [vmem:[%s635 + $0x8] sm:$0xff]
    %v638 = vld [vmem:[%s635 + $0x10] sm:$0xff]
    %v639 = vld [vmem:[%s635 + $0x18] sm:$0xff]
    %640 = vmatprep.subr.mxu0 %v48
    %641 = vmatpush1.msra.mxu0 %v47
    %642 = vmatprep.subr.mxu0 %v52
    %643 = vmatpush1.msra.mxu0 %v51
    %644 = vmatprep.subr.mxu0 %v56
    %645 = vmatpush1.msra.mxu0 %v55
    %646 = vmatprep.subr.mxu0 %v60
    %647 = vmatpush1.msra.mxu0 %v59
    %648 = vmatprep.subr.mxu0 %v64
    %649 = vmatpush1.msra.mxu0 %v63
    %650 = vmatprep.subr.mxu0 %v68
    %651 = vmatpush1.msra.mxu0 %v67
    %652 = vmatprep.subr.mxu0 %v72
    %653 = vmatpush1.msra.mxu0 %v71
    %654 = vmatprep.subr.mxu0 %v76
    %655 = vmatpush1.msra.mxu0 %v75
    %656 = vmatprep.subr.mxu0 %v80
    %657 = vmatpush1.msra.mxu0 %v79
    %658 = vmatprep.subr.mxu0 %v84
    %659 = vmatpush1.msra.mxu0 %v83
    %660 = vmatprep.subr.mxu0 %v88
    %661 = vmatpush1.msra.mxu0 %v87
    %662 = vmatprep.subr.mxu0 %v92
    %663 = vmatpush1.msra.mxu0 %v91
    %664 = vmatprep.subr.mxu0 %v96
    %665 = vmatpush1.msra.mxu0 %v95
    %666 = vmatprep.subr.mxu0 %v100
    %667 = vmatpush1.msra.mxu0 %v99
    %668 = vmatprep.subr.mxu0 %v104
    %669 = vmatpush1.msra.mxu0 %v103
    %670 = vmatprep.subr.mxu0 %v108
    %671 = vmatpush1.msra.mxu0 %v107
    %672 = vmatprep.subr.mxu0 0.0
    %673 = vmatpush1.msra.mxu0 0.0
    %674 = vmatprep.subr.mxu0 0.0
    %675 = vmatpush1.msra.mxu0 0.0
    %676 = vmatprep.subr.mxu0 0.0
    %677 = vmatpush1.msra.mxu0 0.0
    %678 = vmatprep.subr.mxu0 0.0
    %679 = vmatpush1.msra.mxu0 0.0
    %680 = vmatprep.subr.mxu0 0.0
    %681 = vmatpush1.msra.mxu0 0.0
    %682 = vmatprep.subr.mxu0 0.0
    %683 = vmatpush1.msra.mxu0 0.0
    %684 = vmatprep.subr.mxu0 0.0
    %685 = vmatpush1.msra.mxu0 0.0
    %686 = vmatprep.subr.mxu0 0.0
    %687 = vmatpush1.msra.mxu0 0.0
    %688 = vmatprep.subr.mxu0 0.0
    %689 = vmatpush1.msra.mxu0 0.0
    %690 = vmatprep.subr.mxu0 0.0
    %691 = vmatpush1.msra.mxu0 0.0
    %692 = vmatprep.subr.mxu0 0.0
    %693 = vmatpush1.msra.mxu0 0.0
    %694 = vmatprep.subr.mxu0 0.0
    %695 = vmatpush1.msra.mxu0 0.0
    %696 = vmatprep.subr.mxu0 0.0
    %697 = vmatpush1.msra.mxu0 0.0
    %698 = vmatprep.subr.mxu0 0.0
    %699 = vmatpush1.msra.mxu0 0.0
    %700 = vmatprep.subr.mxu0 0.0
    %701 = vmatpush1.msra.mxu0 0.0
    %702 = vmatprep.subr.mxu0 0.0
    %703 = vmatpush1.msra.mxu0 0.0
    %704 = vmatprep.mubr.f32.mxu0 0.0
    %705 = vmatmul.mubr.f32.gmra.mrb[0].mxu0 %v634
    %v706 = vpop.f32.mrb[0].mxu0
    %v707 = vadd.f32 0.0, %v706
    %v708 = vpop.f32.mrb[0].mxu0
    %v709 = vadd.f32 0.0, %v708
    %710 = vdwg.mxu0
    %711 = vmatprep.subr.mxu0 %v50
    %712 = vmatpush1.msra.mxu0 %v49
    %713 = vmatprep.subr.mxu0 %v54
    %714 = vmatpush1.msra.mxu0 %v53
    %715 = vmatprep.subr.mxu0 %v58
    %716 = vmatpush1.msra.mxu0 %v57
    %717 = vmatprep.subr.mxu0 %v62
    %718 = vmatpush1.msra.mxu0 %v61
    %719 = vmatprep.subr.mxu0 %v66
    %720 = vmatpush1.msra.mxu0 %v65
    %721 = vmatprep.subr.mxu0 %v70
    %722 = vmatpush1.msra.mxu0 %v69
    %723 = vmatprep.subr.mxu0 %v74
    %724 = vmatpush1.msra.mxu0 %v73
    %725 = vmatprep.subr.mxu0 %v78
    %726 = vmatpush1.msra.mxu0 %v77
    %727 = vmatprep.subr.mxu0 %v82
    %728 = vmatpush1.msra.mxu0 %v81
    %729 = vmatprep.subr.mxu0 %v86
    %730 = vmatpush1.msra.mxu0 %v85
    %731 = vmatprep.subr.mxu0 %v90
    %732 = vmatpush1.msra.mxu0 %v89
    %733 = vmatprep.subr.mxu0 %v94
    %734 = vmatpush1.msra.mxu0 %v93
    %735 = vmatprep.subr.mxu0 %v98
    %736 = vmatpush1.msra.mxu0 %v97
    %737 = vmatprep.subr.mxu0 %v102
    %738 = vmatpush1.msra.mxu0 %v101
    %739 = vmatprep.subr.mxu0 %v106
    %740 = vmatpush1.msra.mxu0 %v105
    %741 = vmatprep.subr.mxu0 %v110
    %742 = vmatpush1.msra.mxu0 %v109
    %743 = vmatprep.subr.mxu0 0.0
    %744 = vmatpush1.msra.mxu0 0.0
    %745 = vmatprep.subr.mxu0 0.0
    %746 = vmatpush1.msra.mxu0 0.0
    %747 = vmatprep.subr.mxu0 0.0
    %748 = vmatpush1.msra.mxu0 0.0
    %749 = vmatprep.subr.mxu0 0.0
    %750 = vmatpush1.msra.mxu0 0.0
    %751 = vmatprep.subr.mxu0 0.0
    %752 = vmatpush1.msra.mxu0 0.0
    %753 = vmatprep.subr.mxu0 0.0
    %754 = vmatpush1.msra.mxu0 0.0
    %755 = vmatprep.subr.mxu0 0.0
    %756 = vmatpush1.msra.mxu0 0.0
    %757 = vmatprep.subr.mxu0 0.0
    %758 = vmatpush1.msra.mxu0 0.0
    %759 = vmatprep.subr.mxu0 0.0
    %760 = vmatpush1.msra.mxu0 0.0
    %761 = vmatprep.subr.mxu0 0.0
    %762 = vmatpush1.msra.mxu0 0.0
    %763 = vmatprep.subr.mxu0 0.0
    %764 = vmatpush1.msra.mxu0 0.0
    %765 = vmatprep.subr.mxu0 0.0
    %766 = vmatpush1.msra.mxu0 0.0
    %767 = vmatprep.subr.mxu0 0.0
    %768 = vmatpush1.msra.mxu0 0.0
    %769 = vmatprep.subr.mxu0 0.0
    %770 = vmatpush1.msra.mxu0 0.0
    %771 = vmatprep.subr.mxu0 0.0
    %772 = vmatpush1.msra.mxu0 0.0
    %773 = vmatprep.subr.mxu0 0.0
    %774 = vmatpush1.msra.mxu0 0.0
    %775 = vmatprep.mubr.f32.mxu0 0.0
    %776 = vmatmul.mubr.f32.gmra.mrb[0].mxu0 %v634
    %v777 = vpop.f32.mrb[0].mxu0
    %v778 = vadd.f32 0.0, %v777
    %v779 = vpop.f32.mrb[0].mxu0
    %v780 = vadd.f32 0.0, %v779
    %781 = vdwg.mxu0
    %v782 = vadd.f32 %v636, %v707
    %v783 = vadd.f32 %v637, %v709
    %v784 = vadd.f32 %v638, %v778
    %v785 = vadd.f32 %v639, %v780
    %v786 = vxor.u32 %v782, 2147483648
    %v787 = vmul.f32 %v786, 1.442695
    %v788 = vpow.pop %v787
    %v789 = vadd.f32 %v788, 1.0
    %v790 = vrcp.pop %v789
    %v791 = vmul.f32 1.0, %v790
    %v792 = vxor.u32 %v783, 2147483648
    %v793 = vmul.f32 %v792, 1.442695
    %v794 = vpow.pop %v793
    %v795 = vadd.f32 %v794, 1.0
    %v796 = vrcp.pop %v795
    %v797 = vmul.f32 1.0, %v796
    %v798 = vtanh.pop %v784
    %v799 = vxor.u32 %v785, 2147483648
    %v800 = vmul.f32 %v799, 1.442695
    %v801 = vpow.pop %v800
    %v802 = vadd.f32 %v801, 1.0
    %v803 = vrcp.pop %v802
    %v804 = vmul.f32 1.0, %v803
    %v805 = vmul.f32 %v797, %v632
    %v806 = vmul.f32 %v791, %v798
    %v807 = vadd.f32 %v805, %v806
    %v808 = vtanh.pop %v807
    %v809 = vmul.f32 %v804, %v808
    %s810 = scalar_lea.vmem [#allocation3], 128
    %v811 = vld [vmem:[%s810] sm:$0xff]
    %v812 = vld [vmem:[%s810 + $0x8] sm:$0xff]
    %v813 = vld [vmem:[%s810 + $0x10] sm:$0xff]
    %v814 = vld [vmem:[%s810 + $0x18] sm:$0xff]
    %815 = vmatprep.subr.mxu0 %v48
    %816 = vmatpush1.msra.mxu0 %v47
    %817 = vmatprep.subr.mxu0 %v52
    %818 = vmatpush1.msra.mxu0 %v51
    %819 = vmatprep.subr.mxu0 %v56
    %820 = vmatpush1.msra.mxu0 %v55
    %821 = vmatprep.subr.mxu0 %v60
    %822 = vmatpush1.msra.mxu0 %v59
    %823 = vmatprep.subr.mxu0 %v64
    %824 = vmatpush1.msra.mxu0 %v63
    %825 = vmatprep.subr.mxu0 %v68
    %826 = vmatpush1.msra.mxu0 %v67
    %827 = vmatprep.subr.mxu0 %v72
    %828 = vmatpush1.msra.mxu0 %v71
    %829 = vmatprep.subr.mxu0 %v76
    %830 = vmatpush1.msra.mxu0 %v75
    %831 = vmatprep.subr.mxu0 %v80
    %832 = vmatpush1.msra.mxu0 %v79
    %833 = vmatprep.subr.mxu0 %v84
    %834 = vmatpush1.msra.mxu0 %v83
    %835 = vmatprep.subr.mxu0 %v88
    %836 = vmatpush1.msra.mxu0 %v87
    %837 = vmatprep.subr.mxu0 %v92
    %838 = vmatpush1.msra.mxu0 %v91
    %839 = vmatprep.subr.mxu0 %v96
    %840 = vmatpush1.msra.mxu0 %v95
    %841 = vmatprep.subr.mxu0 %v100
    %842 = vmatpush1.msra.mxu0 %v99
    %843 = vmatprep.subr.mxu0 %v104
    %844 = vmatpush1.msra.mxu0 %v103
    %845 = vmatprep.subr.mxu0 %v108
    %846 = vmatpush1.msra.mxu0 %v107
    %847 = vmatprep.subr.mxu0 0.0
    %848 = vmatpush1.msra.mxu0 0.0
    %849 = vmatprep.subr.mxu0 0.0
    %850 = vmatpush1.msra.mxu0 0.0
    %851 = vmatprep.subr.mxu0 0.0
    %852 = vmatpush1.msra.mxu0 0.0
    %853 = vmatprep.subr.mxu0 0.0
    %854 = vmatpush1.msra.mxu0 0.0
    %855 = vmatprep.subr.mxu0 0.0
    %856 = vmatpush1.msra.mxu0 0.0
    %857 = vmatprep.subr.mxu0 0.0
    %858 = vmatpush1.msra.mxu0 0.0
    %859 = vmatprep.subr.mxu0 0.0
    %860 = vmatpush1.msra.mxu0 0.0
    %861 = vmatprep.subr.mxu0 0.0
    %862 = vmatpush1.msra.mxu0 0.0
    %863 = vmatprep.subr.mxu0 0.0
    %864 = vmatpush1.msra.mxu0 0.0
    %865 = vmatprep.subr.mxu0 0.0
    %866 = vmatpush1.msra.mxu0 0.0
    %867 = vmatprep.subr.mxu0 0.0
    %868 = vmatpush1.msra.mxu0 0.0
    %869 = vmatprep.subr.mxu0 0.0
    %870 = vmatpush1.msra.mxu0 0.0
    %871 = vmatprep.subr.mxu0 0.0
    %872 = vmatpush1.msra.mxu0 0.0
    %873 = vmatprep.subr.mxu0 0.0
    %874 = vmatpush1.msra.mxu0 0.0
    %875 = vmatprep.subr.mxu0 0.0
    %876 = vmatpush1.msra.mxu0 0.0
    %877 = vmatprep.subr.mxu0 0.0
    %878 = vmatpush1.msra.mxu0 0.0
    %879 = vmatprep.mubr.f32.mxu0 0.0
    %880 = vmatmul.mubr.f32.gmra.mrb[0].mxu0 %v809
    %v881 = vpop.f32.mrb[0].mxu0
    %v882 = vadd.f32 0.0, %v881
    %v883 = vpop.f32.mrb[0].mxu0
    %v884 = vadd.f32 0.0, %v883
    %885 = vdwg.mxu0
    %886 = vmatprep.subr.mxu0 %v50
    %887 = vmatpush1.msra.mxu0 %v49
    %888 = vmatprep.subr.mxu0 %v54
    %889 = vmatpush1.msra.mxu0 %v53
    %890 = vmatprep.subr.mxu0 %v58
    %891 = vmatpush1.msra.mxu0 %v57
    %892 = vmatprep.subr.mxu0 %v62
    %893 = vmatpush1.msra.mxu0 %v61
    %894 = vmatprep.subr.mxu0 %v66
    %895 = vmatpush1.msra.mxu0 %v65
    %896 = vmatprep.subr.mxu0 %v70
    %897 = vmatpush1.msra.mxu0 %v69
    %898 = vmatprep.subr.mxu0 %v74
    %899 = vmatpush1.msra.mxu0 %v73
    %900 = vmatprep.subr.mxu0 %v78
    %901 = vmatpush1.msra.mxu0 %v77
    %902 = vmatprep.subr.mxu0 %v82
    %903 = vmatpush1.msra.mxu0 %v81
    %904 = vmatprep.subr.mxu0 %v86
    %905 = vmatpush1.msra.mxu0 %v85
    %906 = vmatprep.subr.mxu0 %v90
    %907 = vmatpush1.msra.mxu0 %v89
    %908 = vmatprep.subr.mxu0 %v94
    %909 = vmatpush1.msra.mxu0 %v93
    %910 = vmatprep.subr.mxu0 %v98
    %911 = vmatpush1.msra.mxu0 %v97
    %912 = vmatprep.subr.mxu0 %v102
    %913 = vmatpush1.msra.mxu0 %v101
    %914 = vmatprep.subr.mxu0 %v106
    %915 = vmatpush1.msra.mxu0 %v105
    %916 = vmatprep.subr.mxu0 %v110
    %917 = vmatpush1.msra.mxu0 %v109
    %918 = vmatprep.subr.mxu0 0.0
    %919 = vmatpush1.msra.mxu0 0.0
    %920 = vmatprep.subr.mxu0 0.0
    %921 = vmatpush1.msra.mxu0 0.0
    %922 = vmatprep.subr.mxu0 0.0
    %923 = vmatpush1.msra.mxu0 0.0
    %924 = vmatprep.subr.mxu0 0.0
    %925 = vmatpush1.msra.mxu0 0.0
    %926 = vmatprep.subr.mxu0 0.0
    %927 = vmatpush1.msra.mxu0 0.0
    %928 = vmatprep.subr.mxu0 0.0
    %929 = vmatpush1.msra.mxu0 0.0
    %930 = vmatprep.subr.mxu0 0.0
    %931 = vmatpush1.msra.mxu0 0.0
    %932 = vmatprep.subr.mxu0 0.0
    %933 = vmatpush1.msra.mxu0 0.0
    %934 = vmatprep.subr.mxu0 0.0
    %935 = vmatpush1.msra.mxu0 0.0
    %936 = vmatprep.subr.mxu0 0.0
    %937 = vmatpush1.msra.mxu0 0.0
    %938 = vmatprep.subr.mxu0 0.0
    %939 = vmatpush1.msra.mxu0 0.0
    %940 = vmatprep.subr.mxu0 0.0
    %941 = vmatpush1.msra.mxu0 0.0
    %942 = vmatprep.subr.mxu0 0.0
    %943 = vmatpush1.msra.mxu0 0.0
    %944 = vmatprep.subr.mxu0 0.0
    %945 = vmatpush1.msra.mxu0 0.0
    %946 = vmatprep.subr.mxu0 0.0
    %947 = vmatpush1.msra.mxu0 0.0
    %948 = vmatprep.subr.mxu0 0.0
    %949 = vmatpush1.msra.mxu0 0.0
    %950 = vmatprep.mubr.f32.mxu0 0.0
    %951 = vmatmul.mubr.f32.gmra.mrb[0].mxu0 %v809
    %v952 = vpop.f32.mrb[0].mxu0
    %v953 = vadd.f32 0.0, %v952
    %v954 = vpop.f32.mrb[0].mxu0
    %v955 = vadd.f32 0.0, %v954
    %956 = vdwg.mxu0
    %v957 = vadd.f32 %v811, %v882
    %v958 = vadd.f32 %v812, %v884
    %v959 = vadd.f32 %v813, %v953
    %v960 = vadd.f32 %v814, %v955
    %v961 = vxor.u32 %v957, 2147483648
    %v962 = vmul.f32 %v961, 1.442695
    %v963 = vpow.pop %v962
    %v964 = vadd.f32 %v963, 1.0
    %v965 = vrcp.pop %v964
    %v966 = vmul.f32 1.0, %v965
    %v967 = vxor.u32 %v958, 2147483648
    %v968 = vmul.f32 %v967, 1.442695
    %v969 = vpow.pop %v968
    %v970 = vadd.f32 %v969, 1.0
    %v971 = vrcp.pop %v970
    %v972 = vmul.f32 1.0, %v971
    %v973 = vtanh.pop %v959
    %v974 = vxor.u32 %v960, 2147483648
    %v975 = vmul.f32 %v974, 1.442695
    %v976 = vpow.pop %v975
    %v977 = vadd.f32 %v976, 1.0
    %v978 = vrcp.pop %v977
    %v979 = vmul.f32 1.0, %v978
    %v980 = vmul.f32 %v972, %v807
    %v981 = vmul.f32 %v966, %v973
    %v982 = vadd.f32 %v980, %v981
    %v983 = vtanh.pop %v982
    %v984 = vmul.f32 %v979, %v983
    %s985 = scalar_lea.vmem [#allocation3], 160
    %v986 = vld [vmem:[%s985] sm:$0xff]
    %v987 = vld [vmem:[%s985 + $0x8] sm:$0xff]
    %v988 = vld [vmem:[%s985 + $0x10] sm:$0xff]
    %v989 = vld [vmem:[%s985 + $0x18] sm:$0xff]
    %990 = vmatprep.subr.mxu0 %v48
    %991 = vmatpush1.msra.mxu0 %v47
    %992 = vmatprep.subr.mxu0 %v52
    %993 = vmatpush1.msra.mxu0 %v51
    %994 = vmatprep.subr.mxu0 %v56
    %995 = vmatpush1.msra.mxu0 %v55
    %996 = vmatprep.subr.mxu0 %v60
    %997 = vmatpush1.msra.mxu0 %v59
    %998 = vmatprep.subr.mxu0 %v64
    %999 = vmatpush1.msra.mxu0 %v63
    %1000 = vmatprep.subr.mxu0 %v68
    %1001 = vmatpush1.msra.mxu0 %v67
    %1002 = vmatprep.subr.mxu0 %v72
    %1003 = vmatpush1.msra.mxu0 %v71
    %1004 = vmatprep.subr.mxu0 %v76
    %1005 = vmatpush1.msra.mxu0 %v75
    %1006 = vmatprep.subr.mxu0 %v80
    %1007 = vmatpush1.msra.mxu0 %v79
    %1008 = vmatprep.subr.mxu0 %v84
    %1009 = vmatpush1.msra.mxu0 %v83
    %1010 = vmatprep.subr.mxu0 %v88
    %1011 = vmatpush1.msra.mxu0 %v87
    %1012 = vmatprep.subr.mxu0 %v92
    %1013 = vmatpush1.msra.mxu0 %v91
    %1014 = vmatprep.subr.mxu0 %v96
    %1015 = vmatpush1.msra.mxu0 %v95
    %1016 = vmatprep.subr.mxu0 %v100
    %1017 = vmatpush1.msra.mxu0 %v99
    %1018 = vmatprep.subr.mxu0 %v104
    %1019 = vmatpush1.msra.mxu0 %v103
    %1020 = vmatprep.subr.mxu0 %v108
    %1021 = vmatpush1.msra.mxu0 %v107
    %1022 = vmatprep.subr.mxu0 0.0
    %1023 = vmatpush1.msra.mxu0 0.0
    %1024 = vmatprep.subr.mxu0 0.0
    %1025 = vmatpush1.msra.mxu0 0.0
    %1026 = vmatprep.subr.mxu0 0.0
    %1027 = vmatpush1.msra.mxu0 0.0
    %1028 = vmatprep.subr.mxu0 0.0
    %1029 = vmatpush1.msra.mxu0 0.0
    %1030 = vmatprep.subr.mxu0 0.0
    %1031 = vmatpush1.msra.mxu0 0.0
    %1032 = vmatprep.subr.mxu0 0.0
    %1033 = vmatpush1.msra.mxu0 0.0
    %1034 = vmatprep.subr.mxu0 0.0
    %1035 = vmatpush1.msra.mxu0 0.0
    %1036 = vmatprep.subr.mxu0 0.0
    %1037 = vmatpush1.msra.mxu0 0.0
    %1038 = vmatprep.subr.mxu0 0.0
    %1039 = vmatpush1.msra.mxu0 0.0
    %1040 = vmatprep.subr.mxu0 0.0
    %1041 = vmatpush1.msra.mxu0 0.0
    %1042 = vmatprep.subr.mxu0 0.0
    %1043 = vmatpush1.msra.mxu0 0.0
    %1044 = vmatprep.subr.mxu0 0.0
    %1045 = vmatpush1.msra.mxu0 0.0
    %1046 = vmatprep.subr.mxu0 0.0
    %1047 = vmatpush1.msra.mxu0 0.0
    %1048 = vmatprep.subr.mxu0 0.0
    %1049 = vmatpush1.msra.mxu0 0.0
    %1050 = vmatprep.subr.mxu0 0.0
    %1051 = vmatpush1.msra.mxu0 0.0
    %1052 = vmatprep.subr.mxu0 0.0
    %1053 = vmatpush1.msra.mxu0 0.0
    %1054 = vmatprep.mubr.f32.mxu0 0.0
    %1055 = vmatmul.mubr.f32.gmra.mrb[0].mxu0 %v984
    %v1056 = vpop.f32.mrb[0].mxu0
    %v1057 = vadd.f32 0.0, %v1056
    %v1058 = vpop.f32.mrb[0].mxu0
    %v1059 = vadd.f32 0.0, %v1058
    %1060 = vdwg.mxu0
    %1061 = vmatprep.subr.mxu0 %v50
    %1062 = vmatpush1.msra.mxu0 %v49
    %1063 = vmatprep.subr.mxu0 %v54
    %1064 = vmatpush1.msra.mxu0 %v53
    %1065 = vmatprep.subr.mxu0 %v58
    %1066 = vmatpush1.msra.mxu0 %v57
    %1067 = vmatprep.subr.mxu0 %v62
    %1068 = vmatpush1.msra.mxu0 %v61
    %1069 = vmatprep.subr.mxu0 %v66
    %1070 = vmatpush1.msra.mxu0 %v65
    %1071 = vmatprep.subr.mxu0 %v70
    %1072 = vmatpush1.msra.mxu0 %v69
    %1073 = vmatprep.subr.mxu0 %v74
    %1074 = vmatpush1.msra.mxu0 %v73
    %1075 = vmatprep.subr.mxu0 %v78
    %1076 = vmatpush1.msra.mxu0 %v77
    %1077 = vmatprep.subr.mxu0 %v82
    %1078 = vmatpush1.msra.mxu0 %v81
    %1079 = vmatprep.subr.mxu0 %v86
    %1080 = vmatpush1.msra.mxu0 %v85
    %1081 = vmatprep.subr.mxu0 %v90
    %1082 = vmatpush1.msra.mxu0 %v89
    %1083 = vmatprep.subr.mxu0 %v94
    %1084 = vmatpush1.msra.mxu0 %v93
    %1085 = vmatprep.subr.mxu0 %v98
    %1086 = vmatpush1.msra.mxu0 %v97
    %1087 = vmatprep.subr.mxu0 %v102
    %1088 = vmatpush1.msra.mxu0 %v101
    %1089 = vmatprep.subr.mxu0 %v106
    %1090 = vmatpush1.msra.mxu0 %v105
    %1091 = vmatprep.subr.mxu0 %v110
    %1092 = vmatpush1.msra.mxu0 %v109
    %1093 = vmatprep.subr.mxu0 0.0
    %1094 = vmatpush1.msra.mxu0 0.0
    %1095 = vmatprep.subr.mxu0 0.0
    %1096 = vmatpush1.msra.mxu0 0.0
    %1097 = vmatprep.subr.mxu0 0.0
    %1098 = vmatpush1.msra.mxu0 0.0
    %1099 = vmatprep.subr.mxu0 0.0
    %1100 = vmatpush1.msra.mxu0 0.0
    %1101 = vmatprep.subr.mxu0 0.0
    %1102 = vmatpush1.msra.mxu0 0.0
    %1103 = vmatprep.subr.mxu0 0.0
    %1104 = vmatpush1.msra.mxu0 0.0
    %1105 = vmatprep.subr.mxu0 0.0
    %1106 = vmatpush1.msra.mxu0 0.0
    %1107 = vmatprep.subr.mxu0 0.0
    %1108 = vmatpush1.msra.mxu0 0.0
    %1109 = vmatprep.subr.mxu0 0.0
    %1110 = vmatpush1.msra.mxu0 0.0
    %1111 = vmatprep.subr.mxu0 0.0
    %1112 = vmatpush1.msra.mxu0 0.0
    %1113 = vmatprep.subr.mxu0 0.0
    %1114 = vmatpush1.msra.mxu0 0.0
    %1115 = vmatprep.subr.mxu0 0.0
    %1116 = vmatpush1.msra.mxu0 0.0
    %1117 = vmatprep.subr.mxu0 0.0
    %1118 = vmatpush1.msra.mxu0 0.0
    %1119 = vmatprep.subr.mxu0 0.0
    %1120 = vmatpush1.msra.mxu0 0.0
    %1121 = vmatprep.subr.mxu0 0.0
    %1122 = vmatpush1.msra.mxu0 0.0
    %1123 = vmatprep.subr.mxu0 0.0
    %1124 = vmatpush1.msra.mxu0 0.0
    %1125 = vmatprep.mubr.f32.mxu0 0.0
    %1126 = vmatmul.mubr.f32.gmra.mrb[0].mxu0 %v984
    %v1127 = vpop.f32.mrb[0].mxu0
    %v1128 = vadd.f32 0.0, %v1127
    %v1129 = vpop.f32.mrb[0].mxu0
    %v1130 = vadd.f32 0.0, %v1129
    %1131 = vdwg.mxu0
    %v1132 = vadd.f32 %v986, %v1057
    %v1133 = vadd.f32 %v987, %v1059
    %v1134 = vadd.f32 %v988, %v1128
    %v1135 = vadd.f32 %v989, %v1130
    %v1136 = vxor.u32 %v1132, 2147483648
    %v1137 = vmul.f32 %v1136, 1.442695
    %v1138 = vpow.pop %v1137
    %v1139 = vadd.f32 %v1138, 1.0
    %v1140 = vrcp.pop %v1139
    %v1141 = vmul.f32 1.0, %v1140
    %v1142 = vxor.u32 %v1133, 2147483648
    %v1143 = vmul.f32 %v1142, 1.442695
    %v1144 = vpow.pop %v1143
    %v1145 = vadd.f32 %v1144, 1.0
    %v1146 = vrcp.pop %v1145
    %v1147 = vmul.f32 1.0, %v1146
    %v1148 = vtanh.pop %v1134
    %v1149 = vxor.u32 %v1135, 2147483648
    %v1150 = vmul.f32 %v1149, 1.442695
    %v1151 = vpow.pop %v1150
    %v1152 = vadd.f32 %v1151, 1.0
    %v1153 = vrcp.pop %v1152
    %v1154 = vmul.f32 1.0, %v1153
    %v1155 = vmul.f32 %v1147, %v982
    %v1156 = vmul.f32 %v1141, %v1148
    %v1157 = vadd.f32 %v1155, %v1156
    %v1158 = vtanh.pop %v1157
    %v1159 = vmul.f32 %v1154, %v1158
    %s1160 = scalar_lea.vmem [#allocation3], 192
    %v1161 = vld [vmem:[%s1160] sm:$0xff]
    %v1162 = vld [vmem:[%s1160 + $0x8] sm:$0xff]
    %v1163 = vld [vmem:[%s1160 + $0x10] sm:$0xff]
    %v1164 = vld [vmem:[%s1160 + $0x18] sm:$0xff]
    %1165 = vmatprep.subr.mxu0 %v48
    %1166 = vmatpush1.msra.mxu0 %v47
    %1167 = vmatprep.subr.mxu0 %v52
    %1168 = vmatpush1.msra.mxu0 %v51
    %1169 = vmatprep.subr.mxu0 %v56
    %1170 = vmatpush1.msra.mxu0 %v55
    %1171 = vmatprep.subr.mxu0 %v60
    %1172 = vmatpush1.msra.mxu0 %v59
    %1173 = vmatprep.subr.mxu0 %v64
    %1174 = vmatpush1.msra.mxu0 %v63
    %1175 = vmatprep.subr.mxu0 %v68
    %1176 = vmatpush1.msra.mxu0 %v67
    %1177 = vmatprep.subr.mxu0 %v72
    %1178 = vmatpush1.msra.mxu0 %v71
    %1179 = vmatprep.subr.mxu0 %v76
    %1180 = vmatpush1.msra.mxu0 %v75
    %1181 = vmatprep.subr.mxu0 %v80
    %1182 = vmatpush1.msra.mxu0 %v79
    %1183 = vmatprep.subr.mxu0 %v84
    %1184 = vmatpush1.msra.mxu0 %v83
    %1185 = vmatprep.subr.mxu0 %v88
    %1186 = vmatpush1.msra.mxu0 %v87
    %1187 = vmatprep.subr.mxu0 %v92
    %1188 = vmatpush1.msra.mxu0 %v91
    %1189 = vmatprep.subr.mxu0 %v96
    %1190 = vmatpush1.msra.mxu0 %v95
    %1191 = vmatprep.subr.mxu0 %v100
    %1192 = vmatpush1.msra.mxu0 %v99
    %1193 = vmatprep.subr.mxu0 %v104
    %1194 = vmatpush1.msra.mxu0 %v103
    %1195 = vmatprep.subr.mxu0 %v108
    %1196 = vmatpush1.msra.mxu0 %v107
    %1197 = vmatprep.subr.mxu0 0.0
    %1198 = vmatpush1.msra.mxu0 0.0
    %1199 = vmatprep.subr.mxu0 0.0
    %1200 = vmatpush1.msra.mxu0 0.0
    %1201 = vmatprep.subr.mxu0 0.0
    %1202 = vmatpush1.msra.mxu0 0.0
    %1203 = vmatprep.subr.mxu0 0.0
    %1204 = vmatpush1.msra.mxu0 0.0
    %1205 = vmatprep.subr.mxu0 0.0
    %1206 = vmatpush1.msra.mxu0 0.0
    %1207 = vmatprep.subr.mxu0 0.0
    %1208 = vmatpush1.msra.mxu0 0.0
    %1209 = vmatprep.subr.mxu0 0.0
    %1210 = vmatpush1.msra.mxu0 0.0
    %1211 = vmatprep.subr.mxu0 0.0
    %1212 = vmatpush1.msra.mxu0 0.0
    %1213 = vmatprep.subr.mxu0 0.0
    %1214 = vmatpush1.msra.mxu0 0.0
    %1215 = vmatprep.subr.mxu0 0.0
    %1216 = vmatpush1.msra.mxu0 0.0
    %1217 = vmatprep.subr.mxu0 0.0
    %1218 = vmatpush1.msra.mxu0 0.0
    %1219 = vmatprep.subr.mxu0 0.0
    %1220 = vmatpush1.msra.mxu0 0.0
    %1221 = vmatprep.subr.mxu0 0.0
    %1222 = vmatpush1.msra.mxu0 0.0
    %1223 = vmatprep.subr.mxu0 0.0
    %1224 = vmatpush1.msra.mxu0 0.0
    %1225 = vmatprep.subr.mxu0 0.0
    %1226 = vmatpush1.msra.mxu0 0.0
    %1227 = vmatprep.subr.mxu0 0.0
    %1228 = vmatpush1.msra.mxu0 0.0
    %1229 = vmatprep.mubr.f32.mxu0 0.0
    %1230 = vmatmul.mubr.f32.gmra.mrb[0].mxu0 %v1159
    %v1231 = vpop.f32.mrb[0].mxu0
    %v1232 = vadd.f32 0.0, %v1231
    %v1233 = vpop.f32.mrb[0].mxu0
    %v1234 = vadd.f32 0.0, %v1233
    %1235 = vdwg.mxu0
    %1236 = vmatprep.subr.mxu0 %v50
    %1237 = vmatpush1.msra.mxu0 %v49
    %1238 = vmatprep.subr.mxu0 %v54
    %1239 = vmatpush1.msra.mxu0 %v53
    %1240 = vmatprep.subr.mxu0 %v58
    %1241 = vmatpush1.msra.mxu0 %v57
    %1242 = vmatprep.subr.mxu0 %v62
    %1243 = vmatpush1.msra.mxu0 %v61
    %1244 = vmatprep.subr.mxu0 %v66
    %1245 = vmatpush1.msra.mxu0 %v65
    %1246 = vmatprep.subr.mxu0 %v70
    %1247 = vmatpush1.msra.mxu0 %v69
    %1248 = vmatprep.subr.mxu0 %v74
    %1249 = vmatpush1.msra.mxu0 %v73
    %1250 = vmatprep.subr.mxu0 %v78
    %1251 = vmatpush1.msra.mxu0 %v77
    %1252 = vmatprep.subr.mxu0 %v82
    %1253 = vmatpush1.msra.mxu0 %v81
    %1254 = vmatprep.subr.mxu0 %v86
    %1255 = vmatpush1.msra.mxu0 %v85
    %1256 = vmatprep.subr.mxu0 %v90
    %1257 = vmatpush1.msra.mxu0 %v89
    %1258 = vmatprep.subr.mxu0 %v94
    %1259 = vmatpush1.msra.mxu0 %v93
    %1260 = vmatprep.subr.mxu0 %v98
    %1261 = vmatpush1.msra.mxu0 %v97
    %1262 = vmatprep.subr.mxu0 %v102
    %1263 = vmatpush1.msra.mxu0 %v101
    %1264 = vmatprep.subr.mxu0 %v106
    %1265 = vmatpush1.msra.mxu0 %v105
    %1266 = vmatprep.subr.mxu0 %v110
    %1267 = vmatpush1.msra.mxu0 %v109
    %1268 = vmatprep.subr.mxu0 0.0
    %1269 = vmatpush1.msra.mxu0 0.0
    %1270 = vmatprep.subr.mxu0 0.0
    %1271 = vmatpush1.msra.mxu0 0.0
    %1272 = vmatprep.subr.mxu0 0.0
    %1273 = vmatpush1.msra.mxu0 0.0
    %1274 = vmatprep.subr.mxu0 0.0
    %1275 = vmatpush1.msra.mxu0 0.0
    %1276 = vmatprep.subr.mxu0 0.0
    %1277 = vmatpush1.msra.mxu0 0.0
    %1278 = vmatprep.subr.mxu0 0.0
    %1279 = vmatpush1.msra.mxu0 0.0
    %1280 = vmatprep.subr.mxu0 0.0
    %1281 = vmatpush1.msra.mxu0 0.0
    %1282 = vmatprep.subr.mxu0 0.0
    %1283 = vmatpush1.msra.mxu0 0.0
    %1284 = vmatprep.subr.mxu0 0.0
    %1285 = vmatpush1.msra.mxu0 0.0
    %1286 = vmatprep.subr.mxu0 0.0
    %1287 = vmatpush1.msra.mxu0 0.0
    %1288 = vmatprep.subr.mxu0 0.0
    %1289 = vmatpush1.msra.mxu0 0.0
    %1290 = vmatprep.subr.mxu0 0.0
    %1291 = vmatpush1.msra.mxu0 0.0
    %1292 = vmatprep.subr.mxu0 0.0
    %1293 = vmatpush1.msra.mxu0 0.0
    %1294 = vmatprep.subr.mxu0 0.0
    %1295 = vmatpush1.msra.mxu0 0.0
    %1296 = vmatprep.subr.mxu0 0.0
    %1297 = vmatpush1.msra.mxu0 0.0
    %1298 = vmatprep.subr.mxu0 0.0
    %1299 = vmatpush1.msra.mxu0 0.0
    %1300 = vmatprep.mubr.f32.mxu0 0.0
    %1301 = vmatmul.mubr.f32.gmra.mrb[0].mxu0 %v1159
    %v1302 = vpop.f32.mrb[0].mxu0
    %v1303 = vadd.f32 0.0, %v1302
    %v1304 = vpop.f32.mrb[0].mxu0
    %v1305 = vadd.f32 0.0, %v1304
    %1306 = vdwg.mxu0
    %v1307 = vadd.f32 %v1161, %v1232
    %v1308 = vadd.f32 %v1162, %v1234
    %v1309 = vadd.f32 %v1163, %v1303
    %v1310 = vadd.f32 %v1164, %v1305
    %v1311 = vxor.u32 %v1307, 2147483648
    %v1312 = vmul.f32 %v1311, 1.442695
    %v1313 = vpow.pop %v1312
    %v1314 = vadd.f32 %v1313, 1.0
    %v1315 = vrcp.pop %v1314
    %v1316 = vmul.f32 1.0, %v1315
    %v1317 = vxor.u32 %v1308, 2147483648
    %v1318 = vmul.f32 %v1317, 1.442695
    %v1319 = vpow.pop %v1318
    %v1320 = vadd.f32 %v1319, 1.0
    %v1321 = vrcp.pop %v1320
    %v1322 = vmul.f32 1.0, %v1321
    %v1323 = vtanh.pop %v1309
    %v1324 = vxor.u32 %v1310, 2147483648
    %v1325 = vmul.f32 %v1324, 1.442695
    %v1326 = vpow.pop %v1325
    %v1327 = vadd.f32 %v1326, 1.0
    %v1328 = vrcp.pop %v1327
    %v1329 = vmul.f32 1.0, %v1328
    %v1330 = vmul.f32 %v1322, %v1157
    %v1331 = vmul.f32 %v1316, %v1323
    %v1332 = vadd.f32 %v1330, %v1331
    %v1333 = vtanh.pop %v1332
    %v1334 = vmul.f32 %v1329, %v1333
    %s1335 = scalar_lea.vmem [#allocation3], 224
    %v1336 = vld [vmem:[%s1335] sm:$0xff]
    %v1337 = vld [vmem:[%s1335 + $0x8] sm:$0xff]
    %v1338 = vld [vmem:[%s1335 + $0x10] sm:$0xff]
    %v1339 = vld [vmem:[%s1335 + $0x18] sm:$0xff]
    %1340 = vmatprep.subr.mxu0 %v48
    %1341 = vmatpush1.msra.mxu0 %v47
    %1342 = vmatprep.subr.mxu0 %v52
    %1343 = vmatpush1.msra.mxu0 %v51
    %1344 = vmatprep.subr.mxu0 %v56
    %1345 = vmatpush1.msra.mxu0 %v55
    %1346 = vmatprep.subr.mxu0 %v60
    %1347 = vmatpush1.msra.mxu0 %v59
    %1348 = vmatprep.subr.mxu0 %v64
    %1349 = vmatpush1.msra.mxu0 %v63
    %1350 = vmatprep.subr.mxu0 %v68
    %1351 = vmatpush1.msra.mxu0 %v67
    %1352 = vmatprep.subr.mxu0 %v72
    %1353 = vmatpush1.msra.mxu0 %v71
    %1354 = vmatprep.subr.mxu0 %v76
    %1355 = vmatpush1.msra.mxu0 %v75
    %1356 = vmatprep.subr.mxu0 %v80
    %1357 = vmatpush1.msra.mxu0 %v79
    %1358 = vmatprep.subr.mxu0 %v84
    %1359 = vmatpush1.msra.mxu0 %v83
    %1360 = vmatprep.subr.mxu0 %v88
    %1361 = vmatpush1.msra.mxu0 %v87
    %1362 = vmatprep.subr.mxu0 %v92
    %1363 = vmatpush1.msra.mxu0 %v91
    %1364 = vmatprep.subr.mxu0 %v96
    %1365 = vmatpush1.msra.mxu0 %v95
    %1366 = vmatprep.subr.mxu0 %v100
    %1367 = vmatpush1.msra.mxu0 %v99
    %1368 = vmatprep.subr.mxu0 %v104
    %1369 = vmatpush1.msra.mxu0 %v103
    %1370 = vmatprep.subr.mxu0 %v108
    %1371 = vmatpush1.msra.mxu0 %v107
    %1372 = vmatprep.subr.mxu0 0.0
    %1373 = vmatpush1.msra.mxu0 0.0
    %1374 = vmatprep.subr.mxu0 0.0
    %1375 = vmatpush1.msra.mxu0 0.0
    %1376 = vmatprep.subr.mxu0 0.0
    %1377 = vmatpush1.msra.mxu0 0.0
    %1378 = vmatprep.subr.mxu0 0.0
    %1379 = vmatpush1.msra.mxu0 0.0
    %1380 = vmatprep.subr.mxu0 0.0
    %1381 = vmatpush1.msra.mxu0 0.0
    %1382 = vmatprep.subr.mxu0 0.0
    %1383 = vmatpush1.msra.mxu0 0.0
    %1384 = vmatprep.subr.mxu0 0.0
    %1385 = vmatpush1.msra.mxu0 0.0
    %1386 = vmatprep.subr.mxu0 0.0
    %1387 = vmatpush1.msra.mxu0 0.0
    %1388 = vmatprep.subr.mxu0 0.0
    %1389 = vmatpush1.msra.mxu0 0.0
    %1390 = vmatprep.subr.mxu0 0.0
    %1391 = vmatpush1.msra.mxu0 0.0
    %1392 = vmatprep.subr.mxu0 0.0
    %1393 = vmatpush1.msra.mxu0 0.0
    %1394 = vmatprep.subr.mxu0 0.0
    %1395 = vmatpush1.msra.mxu0 0.0
    %1396 = vmatprep.subr.mxu0 0.0
    %1397 = vmatpush1.msra.mxu0 0.0
    %1398 = vmatprep.subr.mxu0 0.0
    %1399 = vmatpush1.msra.mxu0 0.0
    %1400 = vmatprep.subr.mxu0 0.0
    %1401 = vmatpush1.msra.mxu0 0.0
    %1402 = vmatprep.subr.mxu0 0.0
    %1403 = vmatpush1.msra.mxu0 0.0
    %1404 = vmatprep.mubr.f32.mxu0 0.0
    %1405 = vmatmul.mubr.f32.gmra.mrb[0].mxu0 %v1334
    %v1406 = vpop.f32.mrb[0].mxu0
    %v1407 = vadd.f32 0.0, %v1406
    %v1408 = vpop.f32.mrb[0].mxu0
    %v1409 = vadd.f32 0.0, %v1408
    %1410 = vdwg.mxu0
    %1411 = vmatprep.subr.mxu0 %v50
    %1412 = vmatpush1.msra.mxu0 %v49
    %1413 = vmatprep.subr.mxu0 %v54
    %1414 = vmatpush1.msra.mxu0 %v53
    %1415 = vmatprep.subr.mxu0 %v58
    %1416 = vmatpush1.msra.mxu0 %v57
    %1417 = vmatprep.subr.mxu0 %v62
    %1418 = vmatpush1.msra.mxu0 %v61
    %1419 = vmatprep.subr.mxu0 %v66
    %1420 = vmatpush1.msra.mxu0 %v65
    %1421 = vmatprep.subr.mxu0 %v70
    %1422 = vmatpush1.msra.mxu0 %v69
    %1423 = vmatprep.subr.mxu0 %v74
    %1424 = vmatpush1.msra.mxu0 %v73
    %1425 = vmatprep.subr.mxu0 %v78
    %1426 = vmatpush1.msra.mxu0 %v77
    %1427 = vmatprep.subr.mxu0 %v82
    %1428 = vmatpush1.msra.mxu0 %v81
    %1429 = vmatprep.subr.mxu0 %v86
    %1430 = vmatpush1.msra.mxu0 %v85
    %1431 = vmatprep.subr.mxu0 %v90
    %1432 = vmatpush1.msra.mxu0 %v89
    %1433 = vmatprep.subr.mxu0 %v94
    %1434 = vmatpush1.msra.mxu0 %v93
    %1435 = vmatprep.subr.mxu0 %v98
    %1436 = vmatpush1.msra.mxu0 %v97
    %1437 = vmatprep.subr.mxu0 %v102
    %1438 = vmatpush1.msra.mxu0 %v101
    %1439 = vmatprep.subr.mxu0 %v106
    %1440 = vmatpush1.msra.mxu0 %v105
    %1441 = vmatprep.subr.mxu0 %v110
    %1442 = vmatpush1.msra.mxu0 %v109
    %1443 = vmatprep.subr.mxu0 0.0
    %1444 = vmatpush1.msra.mxu0 0.0
    %1445 = vmatprep.subr.mxu0 0.0
    %1446 = vmatpush1.msra.mxu0 0.0
    %1447 = vmatprep.subr.mxu0 0.0
    %1448 = vmatpush1.msra.mxu0 0.0
    %1449 = vmatprep.subr.mxu0 0.0
    %1450 = vmatpush1.msra.mxu0 0.0
    %1451 = vmatprep.subr.mxu0 0.0
    %1452 = vmatpush1.msra.mxu0 0.0
    %1453 = vmatprep.subr.mxu0 0.0
    %1454 = vmatpush1.msra.mxu0 0.0
    %1455 = vmatprep.subr.mxu0 0.0
    %1456 = vmatpush1.msra.mxu0 0.0
    %1457 = vmatprep.subr.mxu0 0.0
    %1458 = vmatpush1.msra.mxu0 0.0
    %1459 = vmatprep.subr.mxu0 0.0
    %1460 = vmatpush1.msra.mxu0 0.0
    %1461 = vmatprep.subr.mxu0 0.0
    %1462 = vmatpush1.msra.mxu0 0.0
    %1463 = vmatprep.subr.mxu0 0.0
    %1464 = vmatpush1.msra.mxu0 0.0
    %1465 = vmatprep.subr.mxu0 0.0
    %1466 = vmatpush1.msra.mxu0 0.0
    %1467 = vmatprep.subr.mxu0 0.0
    %1468 = vmatpush1.msra.mxu0 0.0
    %1469 = vmatprep.subr.mxu0 0.0
    %1470 = vmatpush1.msra.mxu0 0.0
    %1471 = vmatprep.subr.mxu0 0.0
    %1472 = vmatpush1.msra.mxu0 0.0
    %1473 = vmatprep.subr.mxu0 0.0
    %1474 = vmatpush1.msra.mxu0 0.0
    %1475 = vmatprep.mubr.f32.mxu0 0.0
    %1476 = vmatmul.mubr.f32.gmra.mrb[0].mxu0 %v1334
    %v1477 = vpop.f32.mrb[0].mxu0
    %v1478 = vadd.f32 0.0, %v1477
    %v1479 = vpop.f32.mrb[0].mxu0
    %v1480 = vadd.f32 0.0, %v1479
    %1481 = vdwg.mxu0
    %v1482 = vadd.f32 %v1336, %v1407
    %v1483 = vadd.f32 %v1337, %v1409
    %v1484 = vadd.f32 %v1338, %v1478
    %v1485 = vadd.f32 %v1339, %v1480
    %v1486 = vxor.u32 %v1482, 2147483648
    %v1487 = vmul.f32 %v1486, 1.442695
    %v1488 = vpow.pop %v1487
    %v1489 = vadd.f32 %v1488, 1.0
    %v1490 = vrcp.pop %v1489
    %v1491 = vmul.f32 1.0, %v1490
    %v1492 = vxor.u32 %v1483, 2147483648
    %v1493 = vmul.f32 %v1492, 1.442695
    %v1494 = vpow.pop %v1493
    %v1495 = vadd.f32 %v1494, 1.0
    %v1496 = vrcp.pop %v1495
    %v1497 = vmul.f32 1.0, %v1496
    %v1498 = vtanh.pop %v1484
    %v1499 = vxor.u32 %v1485, 2147483648
    %v1500 = vmul.f32 %v1499, 1.442695
    %v1501 = vpow.pop %v1500
    %v1502 = vadd.f32 %v1501, 1.0
    %v1503 = vrcp.pop %v1502
    %v1504 = vmul.f32 1.0, %v1503
    %v1505 = vmul.f32 %v1497, %v1332
    %v1506 = vmul.f32 %v1491, %v1498
    %v1507 = vadd.f32 %v1505, %v1506
    %v1508 = vtanh.pop %v1507
    %v1509 = vmul.f32 %v1504, %v1508
    %v1510 = vmax.f32 %v1509, 0.0
    %v1511 = vld [vmem:[%s2] sm:$0x1]
    %v1513 = vlaneseq
    %v1514 = vshrl.u32 %v1513, 7
    %v1515 = vsub.s32 0, %v1514
    %v1516 = vrot.slane %v1511, %v1515
    %v1518 = vmul.f32 %v1510, %v1516
    %1519 = vadd.xlane.f32.xlu0 %v1518
    %v1520 = vpop.xlane.xlu0 %1519
    %v1521 = vld [vmem:[#allocation2] sm:$0x1]
    %v1523 = vlaneseq
    %v1524 = vshrl.u32 %v1523, 7
    %v1525 = vsub.s32 0, %v1524
    %v1526 = vrot.slane %v1521, %v1525
    %v1528 = vadd.f32 %v1520, %v1526
    %vm1529 = vcmask 7168
    %1530 = vst.msk [vmem:[%s4] sm:$0xff] %vm1529, %v1528
    // Predicated region
    $region26: #{tpu_custom_call.1} parent=1 // pred_check
      _
    $region27: #{tpu_custom_call.1} parent=1 // pred_check_branch
      %1532 = sbr.rel (0) target = $region29
    $region28: #{tpu_custom_call.1} parent=1 // pred_region
      _
    $region29: #{tpu_custom_call.1} parent=1 // pred_fallthru
      _
    // Predicated region
    $region30: #{tpu_custom_call.1} parent=1 // pred_check
      _
    $region31: #{tpu_custom_call.1} parent=1 // pred_check_branch
      %1534 = sbr.rel (0) target = $region33
    $region32: #{tpu_custom_call.1} parent=1 // pred_region
      _
    $region33: #{tpu_custom_call.1} parent=1 // pred_fallthru
      _
    %1535 = vsyncpa [#allocation4], 1
    %1536 = vsyncpa [#allocation6], 1

</llo_original>
